<compile_context>
chip_gen: v7x
topology: tpu7x:2x2x1
jax: 0.10.0
libtpu: 0.0.40
codegen_flags: <defaults>
</compile_context>

<pallas_src>
import functools

import jax
import jax.numpy as jnp
from jax import lax
from jax.experimental import pallas as pl
from jax.experimental.pallas import tpu as pltpu


# ---------------------------------------------------------------------------
# helpers
# ---------------------------------------------------------------------------

def _pick_tile(total, preferred, min_tile):
    """Largest power-of-two-ish tile <= preferred that divides `total`.

    Falls back to the full dimension (always legal for BlockSpec) if no
    aligned divisor is found.
    """
    if total <= preferred:
        return total
    t = preferred
    while t > min_tile and total % t != 0:
        t //= 2
    return t if total % t == 0 else total


def _vmem_limit_bytes(block_bytes):
    # Double-buffered pipeline + headroom, clamped so it stays portable across
    # v5e (16 MiB default scoped / 128 MiB physical), v6e (32/128) and
    # v7x (32/64 MiB).
    return int(min(max(2 * block_bytes + (8 << 20), 32 << 20), 48 << 20))


# ---------------------------------------------------------------------------
# LayerNorm kernel
# ---------------------------------------------------------------------------

def _layernorm_kernel(x_ref, g_ref, b_ref, o_ref, *, eps):
    x = x_ref[...].astype(jnp.float32)
    mu = jnp.mean(x, axis=-1, keepdims=True)
    xc = x - mu
    var = jnp.mean(xc * xc, axis=-1, keepdims=True)
    inv = lax.rsqrt(var + eps)
    y = xc * inv * g_ref[...].astype(jnp.float32) + b_ref[...].astype(jnp.float32)
    o_ref[...] = y.astype(o_ref.dtype)


def layernorm(x, gamma, beta, *, eps=1e-5, tm=256):
    T, D = x.shape
    tm = _pick_tile(T, tm, 8)
    kernel = functools.partial(_layernorm_kernel, eps=eps)
    return pl.pallas_call(
        kernel,
        out_shape=jax.ShapeDtypeStruct((T, D), x.dtype),
        grid_spec=pltpu.PrefetchScalarGridSpec(
            num_scalar_prefetch=0,
            grid=(T // tm,),
            in_specs=[
                pl.BlockSpec((tm, D), lambda i: (i, 0)),
                # gamma/beta never change across the grid -> single-buffered.
                pl.BlockSpec((1, D), lambda i: (0, 0), pipeline_mode=pl.Buffered(1)),
                pl.BlockSpec((1, D), lambda i: (0, 0), pipeline_mode=pl.Buffered(1)),
            ],
            out_specs=pl.BlockSpec((tm, D), lambda i: (i, 0)),
        ),
        compiler_params=pltpu.CompilerParams(
            dimension_semantics=("parallel",),
        ),
    )(x, gamma, beta)


# ---------------------------------------------------------------------------
# Fused Linear (+ bias, optional GELU, optional residual) kernel
# ---------------------------------------------------------------------------

def _linear_kernel(x_ref, w_ref, b_ref, *rest, activation, has_residual):
    if has_residual:
        res_ref, o_ref = rest
    else:
        (o_ref,) = rest
    acc = jnp.dot(x_ref[...], w_ref[...], preferred_element_type=jnp.float32)
    acc = acc + b_ref[...].astype(jnp.float32)
    if activation == "gelu":
        # TODO(synk): PyTorch nn.GELU() defaults to the erf form; tanh approx
        # is used here (EUP path); the reference below uses the same approx.
        acc = jax.nn.gelu(acc, approximate=True)
    if has_residual:
        acc = acc + res_ref[...].astype(jnp.float32)
    o_ref[...] = acc.astype(o_ref.dtype)


def linear(x, w, b, *, residual=None, activation=None, tm=256, tn=512):
    """out = act(x @ w + b) [+ residual]   with x:[T,K], w:[K,N], b:[1,N]."""
    T, K = x.shape
    Kw, N = w.shape
    assert K == Kw and b.shape == (1, N)
    tm = _pick_tile(T, tm, 8)      # MXU row tile (feedback: >= 256 by default)
    tn = _pick_tile(N, tn, 128)    # lane-dense output tile
    grid = (T // tm, N // tn)
    single_n = grid[1] == 1
    itemsize = x.dtype.itemsize
    has_residual = residual is not None

    x_spec = pl.BlockSpec((tm, K), lambda i, j: (i, 0))
    if single_n:
        # Weight / bias block index is constant across the grid -> keep a
        # single resident copy instead of a 2x double buffer.
        w_spec = pl.BlockSpec((K, tn), lambda i, j: (0, j), pipeline_mode=pl.Buffered(1))
        b_spec = pl.BlockSpec((1, tn), lambda i, j: (0, j), pipeline_mode=pl.Buffered(1))
    else:
        # Stream weight columns (large N / v7x-friendly).
        w_spec = pl.BlockSpec((K, tn), lambda i, j: (0, j))
        b_spec = pl.BlockSpec((1, tn), lambda i, j: (0, j))

    in_specs = [x_spec, w_spec, b_spec]
    operands = [x, w, b]
    if has_residual:
        in_specs.append(pl.BlockSpec((tm, tn), lambda i, j: (i, j)))
        operands.append(residual)

    block_bytes = itemsize * (tm * K + K * tn + tn + tm * tn * (2 if has_residual else 1))
    cost = pl.CostEstimate(
        flops=int(2 * T * K * N),
        transcendentals=int(T * N if activation == "gelu" else 0),
        bytes_accessed=int(itemsize * (T * K + K * N + N + T * N * (2 if has_residual else 1))),
    )

    kernel = functools.partial(
        _linear_kernel, activation=activation, has_residual=has_residual)

    return pl.pallas_call(
        kernel,
        out_shape=jax.ShapeDtypeStruct((T, N), x.dtype),
        grid_spec=pltpu.PrefetchScalarGridSpec(
            num_scalar_prefetch=0,
            grid=grid,
            in_specs=in_specs,
            out_specs=pl.BlockSpec((tm, tn), lambda i, j: (i, j)),
        ),
        compiler_params=pltpu.CompilerParams(
            dimension_semantics=("parallel", "parallel"),
            vmem_limit_bytes=_vmem_limit_bytes(block_bytes),
        ),
        cost_estimate=cost,
    )(*operands)


# ---------------------------------------------------------------------------
# Attention core kernel: softmax(q k^T * scale) v  per (batch*head)
# ---------------------------------------------------------------------------

def _attention_kernel(q_ref, k_ref, v_ref, o_ref, *, scale):
    q = q_ref[...].astype(jnp.float32)        # (S, dh)
    k = k_ref[...].astype(jnp.float32)        # (S, dh)
    v = v_ref[...].astype(jnp.float32)        # (S, dh)
    s = lax.dot_general(q, k, (((1,), (1,)), ((), ())),
                        preferred_element_type=jnp.float32) * scale
    s = s - jnp.max(s, axis=-1, keepdims=True)
    p = jnp.exp(s)
    p = p / jnp.sum(p, axis=-1, keepdims=True)
    out = jnp.dot(p, v, preferred_element_type=jnp.float32)
    o_ref[...] = out.astype(o_ref.dtype)


def attention_core(q, k, v, *, scale):
    """q, k, v: [B*heads, S, dh] -> [B*heads, S, dh]."""
    BH, S, dh = q.shape
    kernel = functools.partial(_attention_kernel, scale=scale)
    qkv_spec = pl.BlockSpec((None, S, dh), lambda i: (i, 0, 0))
    return pl.pallas_call(
        kernel,
        out_shape=jax.ShapeDtypeStruct((BH, S, dh), q.dtype),
        grid_spec=pltpu.PrefetchScalarGridSpec(
            num_scalar_prefetch=0,
            grid=(BH,),
            in_specs=[qkv_spec, qkv_spec, qkv_spec],
            out_specs=pl.BlockSpec((None, S, dh), lambda i: (i, 0, 0)),
        ),
        compiler_params=pltpu.CompilerParams(
            dimension_semantics=("parallel",),
        ),
        cost_estimate=pl.CostEstimate(
            flops=int(4 * BH * S * S * dh),
            transcendentals=int(BH * S * S),
            bytes_accessed=int(4 * BH * S * dh * q.dtype.itemsize),
        ),
    )(q, k, v)


# ---------------------------------------------------------------------------
# Encoder forward (composition of the Pallas kernels)
# ---------------------------------------------------------------------------

def encoder_forward(x, params, heads, mask=None):
    """x: [B, S, D] -> [B, S, D]; params: list of per-block parameter dicts."""
    if mask is not None:
        # TODO(synk): attention mask path not implemented (module is exercised
        # with mask=None).
        raise NotImplementedError("mask is not supported")
    B, S, D = x.shape
    assert D % heads == 0
    dh = D // heads
    scale = float(dh) ** -0.5

    h = x.reshape(B * S, D)
    for p in params:
        # --- Residual(PreNorm(Attention)) ---
        hn = layernorm(h, p["ln1_g"], p["ln1_b"])
        qkv = linear(hn, p["wqkv"], p["bqkv"])
        qkv = qkv.reshape(B, S, 3, heads, dh)
        q = qkv[:, :, 0].transpose(0, 2, 1, 3).reshape(B * heads, S, dh)
        k = qkv[:, :, 1].transpose(0, 2, 1, 3).reshape(B * heads, S, dh)
        v = qkv[:, :, 2].transpose(0, 2, 1, 3).reshape(B * heads, S, dh)
        attn = attention_core(q, k, v, scale=scale)
        attn = attn.reshape(B, heads, S, dh).transpose(0, 2, 1, 3).reshape(B * S, D)
        h = linear(attn, p["wo"], p["bo"], residual=h)      # fused out-proj + residual

        # --- Residual(PreNorm(FeedForward)) ---   (Dropout p=0.0 -> no-op)
        hn = layernorm(h, p["ln2_g"], p["ln2_b"])
        hidden = linear(hn, p["w1"], p["b1"], activation="gelu")
        h = linear(hidden, p["w2"], p["b2"], residual=h)    # fused 2nd matmul + residual
    return h.reshape(B, S, D)


def init_encoder_params(key, dim, no_of_blocks, mlp_dim, dtype=jnp.float32):
    params = []
    for _ in range(no_of_blocks):
        key, *ks = jax.random.split(key, 13)
        n = iter(ks)

        def rnd(shape, scale=0.02):
            return (scale * jax.random.normal(next(n), shape)).astype(dtype)

        p = {
            "ln1_g": (1.0 + 0.1 * jax.random.normal(next(n), (1, dim))).astype(dtype),
            "ln1_b": rnd((1, dim), 0.1),
            "wqkv": rnd((dim, 3 * dim)),
            "bqkv": rnd((1, 3 * dim)),
            "wo": rnd((dim, dim)),
            "bo": rnd((1, dim)),
            "ln2_g": (1.0 + 0.1 * jax.random.normal(next(n), (1, dim))).astype(dtype),
            "ln2_b": rnd((1, dim), 0.1),
            "w1": rnd((dim, mlp_dim)),
            "b1": rnd((1, mlp_dim)),
            "w2": rnd((mlp_dim, dim)),
            "b2": rnd((1, dim)),
        }
        params.append(p)
    return params


# ---------------------------------------------------------------------------
# Pure-JAX reference (highest-precision matmuls) for correctness checking
# ---------------------------------------------------------------------------

def _layernorm_ref(x, g, b, eps=1e-5):
    x = x.astype(jnp.float32)
    mu = jnp.mean(x, axis=-1, keepdims=True)
    xc = x - mu
    var = jnp.mean(xc * xc, axis=-1, keepdims=True)
    return xc * lax.rsqrt(var + eps) * g + b


def encoder_reference(x, params, heads, mask=None):
    assert mask is None
    B, S, D = x.shape
    dh = D // heads
    scale = float(dh) ** -0.5
    hp = jax.lax.Precision.HIGHEST

    h = x.reshape(B * S, D).astype(jnp.float32)
    for p in params:
        hn = _layernorm_ref(h, p["ln1_g"], p["ln1_b"])
        qkv = jnp.dot(hn, p["wqkv"], precision=hp) + p["bqkv"]
        qkv = qkv.reshape(B, S, 3, heads, dh)
        q = qkv[:, :, 0].transpose(0, 2, 1, 3)
        k = qkv[:, :, 1].transpose(0, 2, 1, 3)
        v = qkv[:, :, 2].transpose(0, 2, 1, 3)
        s = jnp.einsum("bhqd,bhkd->bhqk", q, k, precision=hp) * scale
        attn = jax.nn.softmax(s, axis=-1)
        o = jnp.einsum("bhqk,bhkd->bhqd", attn, v, precision=hp)
        o = o.transpose(0, 2, 1, 3).reshape(B * S, D)
        h = jnp.dot(o, p["wo"], precision=hp) + p["bo"] + h

        hn = _layernorm_ref(h, p["ln2_g"], p["ln2_b"])
        f = jax.nn.gelu(jnp.dot(hn, p["w1"], precision=hp) + p["b1"], approximate=True)
        h = jnp.dot(f, p["w2"], precision=hp) + p["b2"] + h
    return h.reshape(B, S, D).astype(x.dtype)


if __name__ == "__main__":
    # Small demo shapes consistent with the module.
    batch, seq, dim = 2, 8, 32
    heads, mlp_dim, no_of_blocks = 4, 64, 2

    key = jax.random.PRNGKey(0)
    kx, kp = jax.random.split(key)
    x = jax.random.normal(kx, (batch, seq, dim), dtype=jnp.float32)
    params = init_encoder_params(kp, dim, no_of_blocks, mlp_dim)

    fwd = jax.jit(lambda xx, pp: encoder_forward(xx, pp, heads=heads))
    out = jax.block_until_ready(fwd(x, params))

    ref = encoder_reference(x, params, heads)
    assert out.shape == (batch, seq, dim)
    max_err = float(jnp.max(jnp.abs(out - ref)))
    # Tolerance covers possible MXU input-rounding differences vs the
    # highest-precision XLA reference.
    assert jnp.allclose(out, ref, atol=2e-3, rtol=2e-3), f"max_err={max_err}"

    print("KERNEL_OK")
</pallas_src>

<mosaic_0001>
module attributes {stable_mosaic.version = 11 : i64} {
  func.func @_linear_kernel(%arg0: i32, %arg1: i32, %arg2: memref<16x32xf32, #tpu.memory_space<vmem>>, %arg3: memref<32x96xf32, #tpu.memory_space<vmem>>, %arg4: memref<1x96xf32, #tpu.memory_space<vmem>>, %arg5: memref<16x96xf32, #tpu.memory_space<vmem>>) attributes {dimension_semantics = [#tpu.dimension_semantics<parallel>, #tpu.dimension_semantics<parallel>], iteration_bounds = array<i64: 1, 1>, scalar_prefetch = 0 : i64, scratch_operands = 0 : i64, tpu.core_type = #tpu.core_type<tc>, window_params = [{transform_indices = @transform_0, window_bounds = array<i64: 16, 32>}, {pipeline_mode = #tpu.pipeline_mode<synchronous>, transform_indices = @transform_1, window_bounds = array<i64: 32, 96>}, {pipeline_mode = #tpu.pipeline_mode<synchronous>, transform_indices = @transform_2, window_bounds = array<i64: 1, 96>}, {transform_indices = @transform_3, window_bounds = array<i64: 16, 96>}]} {
    %c0 = arith.constant 0 : index
    %c0_0 = arith.constant 0 : index
    %0 = vector.load %arg2[%c0, %c0_0] : memref<16x32xf32, #tpu.memory_space<vmem>>, vector<16x32xf32>
    %c0_1 = arith.constant 0 : index
    %c0_2 = arith.constant 0 : index
    %1 = vector.load %arg3[%c0_1, %c0_2] : memref<32x96xf32, #tpu.memory_space<vmem>>, vector<32x96xf32>
    %cst = arith.constant dense<0.000000e+00> : vector<16x96xf32>
    %2 = tpu.matmul %0, %1, %cst {dimension_numbers = #tpu.dot_dimension_numbers<[1], [0], [0], [1], [0, 0, 1, 1], [], []>} : vector<16x32xf32>, vector<32x96xf32>, vector<16x96xf32> -> vector<16x96xf32>
    %c0_3 = arith.constant 0 : index
    %c0_4 = arith.constant 0 : index
    %3 = vector.load %arg4[%c0_3, %c0_4] : memref<1x96xf32, #tpu.memory_space<vmem>>, vector<1x96xf32>
    %4 = vector.broadcast %3 : vector<1x96xf32> to vector<16x96xf32>
    %5 = arith.addf %2, %4 : vector<16x96xf32>
    %c0_5 = arith.constant 0 : index
    %c0_6 = arith.constant 0 : index
    %6 = vector.load %arg5[%c0_5, %c0_6] : memref<16x96xf32, #tpu.memory_space<vmem>>, vector<16x96xf32>
    tpu.vector_store %arg5[%c0_5, %c0_6], %5 {strides = array<i32>} : memref<16x96xf32, #tpu.memory_space<vmem>>, vector<16x96xf32>,
    return
  }
  func.func @transform_0(%arg0: i32, %arg1: i32) -> (i32, i32) {
    %c0_i32 = arith.constant 0 : i32
    %c0_i32_0 = arith.constant 0 : i32
    return %arg0, %c0_i32 : i32, i32
  }
  func.func @transform_1(%arg0: i32, %arg1: i32) -> (i32, i32) {
    %c0_i32 = arith.constant 0 : i32
    %c0_i32_0 = arith.constant 0 : i32
    return %c0_i32, %arg1 : i32, i32
  }
  func.func @transform_2(%arg0: i32, %arg1: i32) -> (i32, i32) {
    %c0_i32 = arith.constant 0 : i32
    %c0_i32_0 = arith.constant 0 : i32
    return %c0_i32, %arg1 : i32, i32
  }
  func.func @transform_3(%arg0: i32, %arg1: i32) -> (i32, i32) {
    %c0_i32 = arith.constant 0 : i32
    return %arg0, %arg1 : i32, i32
  }
}

module attributes {stable_mosaic.version = 11 : i64} {
  func.func @_layernorm_kernel(%arg0: i32, %arg1: memref<16x32xf32, #tpu.memory_space<vmem>>, %arg2: memref<1x32xf32, #tpu.memory_space<vmem>>, %arg3: memref<1x32xf32, #tpu.memory_space<vmem>>, %arg4: memref<16x32xf32, #tpu.memory_space<vmem>>) attributes {dimension_semantics = [#tpu.dimension_semantics<parallel>], iteration_bounds = array<i64: 1>, scalar_prefetch = 0 : i64, scratch_operands = 0 : i64, tpu.core_type = #tpu.core_type<tc>, window_params = [{transform_indices = @transform_0, window_bounds = array<i64: 16, 32>}, {pipeline_mode = #tpu.pipeline_mode<synchronous>, transform_indices = @transform_1, window_bounds = array<i64: 1, 32>}, {pipeline_mode = #tpu.pipeline_mode<synchronous>, transform_indices = @transform_2, window_bounds = array<i64: 1, 32>}, {transform_indices = @transform_3, window_bounds = array<i64: 16, 32>}]} {
    %c0 = arith.constant 0 : index
    %c0_0 = arith.constant 0 : index
    %0 = vector.load %arg1[%c0, %c0_0] : memref<16x32xf32, #tpu.memory_space<vmem>>, vector<16x32xf32>
    %cst = arith.constant dense<0.000000e+00> : vector<16xf32>
    %1 = vector.multi_reduction <add>, %0, %cst [1] : vector<16x32xf32> to vector<16xf32>
    %2 = vector.shape_cast %1 : vector<16xf32> to vector<16x1xf32>
    %cst_1 = arith.constant 3.200000e+01 : f32
    %3 = vector.broadcast %cst_1 : f32 to vector<16x1xf32>
    %4 = arith.divf %2, %3 : vector<16x1xf32>
    %5 = vector.broadcast %4 : vector<16x1xf32> to vector<16x32xf32>
    %6 = arith.subf %0, %5 : vector<16x32xf32>
    %7 = arith.mulf %6, %6 : vector<16x32xf32>
    %cst_2 = arith.constant dense<0.000000e+00> : vector<16xf32>
    %8 = vector.multi_reduction <add>, %7, %cst_2 [1] : vector<16x32xf32> to vector<16xf32>
    %9 = vector.shape_cast %8 : vector<16xf32> to vector<16x1xf32>
    %cst_3 = arith.constant 3.200000e+01 : f32
    %10 = vector.broadcast %cst_3 : f32 to vector<16x1xf32>
    %11 = arith.divf %9, %10 : vector<16x1xf32>
    %cst_4 = arith.constant 9.99999974E-6 : f32
    %12 = vector.broadcast %cst_4 : f32 to vector<16x1xf32>
    %13 = arith.addf %11, %12 : vector<16x1xf32>
    %14 = math.rsqrt %13 : vector<16x1xf32>
    %15 = vector.broadcast %14 : vector<16x1xf32> to vector<16x32xf32>
    %16 = arith.mulf %6, %15 : vector<16x32xf32>
    %c0_5 = arith.constant 0 : index
    %c0_6 = arith.constant 0 : index
    %17 = vector.load %arg2[%c0_5, %c0_6] : memref<1x32xf32, #tpu.memory_space<vmem>>, vector<1x32xf32>
    %18 = vector.broadcast %17 : vector<1x32xf32> to vector<16x32xf32>
    %19 = arith.mulf %16, %18 : vector<16x32xf32>
    %c0_7 = arith.constant 0 : index
    %c0_8 = arith.constant 0 : index
    %20 = vector.load %arg3[%c0_7, %c0_8] : memref<1x32xf32, #tpu.memory_space<vmem>>, vector<1x32xf32>
    %21 = vector.broadcast %20 : vector<1x32xf32> to vector<16x32xf32>
    %22 = arith.addf %19, %21 : vector<16x32xf32>
    %c0_9 = arith.constant 0 : index
    %c0_10 = arith.constant 0 : index
    %23 = vector.load %arg4[%c0_9, %c0_10] : memref<16x32xf32, #tpu.memory_space<vmem>>, vector<16x32xf32>
    tpu.vector_store %arg4[%c0_9, %c0_10], %22 {strides = array<i32>} : memref<16x32xf32, #tpu.memory_space<vmem>>, vector<16x32xf32>,
    return
  }
  func.func @transform_0(%arg0: i32) -> (i32, i32) {
    %c0_i32 = arith.constant 0 : i32
    %c0_i32_0 = arith.constant 0 : i32
    return %arg0, %c0_i32 : i32, i32
  }
  func.func @transform_1(%arg0: i32) -> (i32, i32) {
    %c0_i32 = arith.constant 0 : i32
    %c0_i32_0 = arith.constant 0 : i32
    %c0_i32_1 = arith.constant 0 : i32
    return %c0_i32, %c0_i32_0 : i32, i32
  }
  func.func @transform_2(%arg0: i32) -> (i32, i32) {
    %c0_i32 = arith.constant 0 : i32
    %c0_i32_0 = arith.constant 0 : i32
    %c0_i32_1 = arith.constant 0 : i32
    return %c0_i32, %c0_i32_0 : i32, i32
  }
  func.func @transform_3(%arg0: i32) -> (i32, i32) {
    %c0_i32 = arith.constant 0 : i32
    %c0_i32_0 = arith.constant 0 : i32
    return %arg0, %c0_i32 : i32, i32
  }
}

module attributes {stable_mosaic.version = 11 : i64} {
  func.func @_attention_kernel(%arg0: i32, %arg1: memref<1x8x8xf32, #tpu.memory_space<vmem>>, %arg2: memref<1x8x8xf32, #tpu.memory_space<vmem>>, %arg3: memref<1x8x8xf32, #tpu.memory_space<vmem>>, %arg4: memref<1x8x8xf32, #tpu.memory_space<vmem>>) attributes {dimension_semantics = [#tpu.dimension_semantics<parallel>], iteration_bounds = array<i64: 8>, scalar_prefetch = 0 : i64, scratch_operands = 0 : i64, tpu.core_type = #tpu.core_type<tc>, window_params = [{transform_indices = @transform_0, window_bounds = array<i64: 1, 8, 8>}, {transform_indices = @transform_1, window_bounds = array<i64: 1, 8, 8>}, {transform_indices = @transform_2, window_bounds = array<i64: 1, 8, 8>}, {transform_indices = @transform_3, window_bounds = array<i64: 1, 8, 8>}]} {
    %c0 = arith.constant 0 : index
    %c0_0 = arith.constant 0 : index
    %c0_1 = arith.constant 0 : index
    %0 = vector.load %arg1[%c0, %c0_0, %c0_1] : memref<1x8x8xf32, #tpu.memory_space<vmem>>, vector<1x8x8xf32>
    %1 = vector.shape_cast %0 : vector<1x8x8xf32> to vector<8x8xf32>
    %c0_2 = arith.constant 0 : index
    %c0_3 = arith.constant 0 : index
    %c0_4 = arith.constant 0 : index
    %2 = vector.load %arg2[%c0_2, %c0_3, %c0_4] : memref<1x8x8xf32, #tpu.memory_space<vmem>>, vector<1x8x8xf32>
    %3 = vector.shape_cast %2 : vector<1x8x8xf32> to vector<8x8xf32>
    %c0_5 = arith.constant 0 : index
    %c0_6 = arith.constant 0 : index
    %c0_7 = arith.constant 0 : index
    %4 = vector.load %arg3[%c0_5, %c0_6, %c0_7] : memref<1x8x8xf32, #tpu.memory_space<vmem>>, vector<1x8x8xf32>
    %5 = vector.shape_cast %4 : vector<1x8x8xf32> to vector<8x8xf32>
    %cst = arith.constant dense<0.000000e+00> : vector<8x8xf32>
    %6 = tpu.matmul %1, %3, %cst {dimension_numbers = #tpu.dot_dimension_numbers<[1], [1], [0], [0], [0, 0, 1, 0], [], []>} : vector<8x8xf32>, vector<8x8xf32>, vector<8x8xf32> -> vector<8x8xf32>
    %cst_8 = arith.constant 0.353553385 : f32
    %7 = vector.broadcast %cst_8 : f32 to vector<8x8xf32>
    %8 = arith.mulf %6, %7 : vector<8x8xf32>
    %cst_9 = arith.constant dense<0xFF800000> : vector<8xf32>
    %9 = vector.multi_reduction <maximumf>, %8, %cst_9 [1] : vector<8x8xf32> to vector<8xf32>
    %10 = vector.shape_cast %9 : vector<8xf32> to vector<8x1xf32>
    %11 = vector.broadcast %10 : vector<8x1xf32> to vector<8x8xf32>
    %12 = arith.subf %8, %11 : vector<8x8xf32>
    %13 = math.exp %12 : vector<8x8xf32>
    %cst_10 = arith.constant dense<0.000000e+00> : vector<8xf32>
    %14 = vector.multi_reduction <add>, %13, %cst_10 [1] : vector<8x8xf32> to vector<8xf32>
    %15 = vector.shape_cast %14 : vector<8xf32> to vector<8x1xf32>
    %16 = vector.broadcast %15 : vector<8x1xf32> to vector<8x8xf32>
    %17 = arith.divf %13, %16 : vector<8x8xf32>
    %cst_11 = arith.constant dense<0.000000e+00> : vector<8x8xf32>
    %18 = tpu.matmul %17, %5, %cst_11 {dimension_numbers = #tpu.dot_dimension_numbers<[1], [0], [0], [1], [0, 0, 1, 1], [], []>} : vector<8x8xf32>, vector<8x8xf32>, vector<8x8xf32> -> vector<8x8xf32>
    %c0_12 = arith.constant 0 : index
    %c0_13 = arith.constant 0 : index
    %c0_14 = arith.constant 0 : index
    %19 = vector.load %arg4[%c0_12, %c0_13, %c0_14] : memref<1x8x8xf32, #tpu.memory_space<vmem>>, vector<1x8x8xf32>
    %20 = vector.shape_cast %19 : vector<1x8x8xf32> to vector<8x8xf32>
    %21 = vector.shape_cast %18 : vector<8x8xf32> to vector<1x8x8xf32>
    tpu.vector_store %arg4[%c0_12, %c0_13, %c0_14], %21 {strides = array<i32>} : memref<1x8x8xf32, #tpu.memory_space<vmem>>, vector<1x8x8xf32>,
    return
  }
  func.func @transform_0(%arg0: i32) -> (i32, i32, i32) {
    %c0_i32 = arith.constant 0 : i32
    %c0_i32_0 = arith.constant 0 : i32
    %c0_i32_1 = arith.constant 0 : i32
    return %arg0, %c0_i32, %c0_i32_0 : i32, i32, i32
  }
  func.func @transform_1(%arg0: i32) -> (i32, i32, i32) {
    %c0_i32 = arith.constant 0 : i32
    %c0_i32_0 = arith.constant 0 : i32
    %c0_i32_1 = arith.constant 0 : i32
    return %arg0, %c0_i32, %c0_i32_0 : i32, i32, i32
  }
  func.func @transform_2(%arg0: i32) -> (i32, i32, i32) {
    %c0_i32 = arith.constant 0 : i32
    %c0_i32_0 = arith.constant 0 : i32
    %c0_i32_1 = arith.constant 0 : i32
    return %arg0, %c0_i32, %c0_i32_0 : i32, i32, i32
  }
  func.func @transform_3(%arg0: i32) -> (i32, i32, i32) {
    %c0_i32 = arith.constant 0 : i32
    %c0_i32_0 = arith.constant 0 : i32
    %c0_i32_1 = arith.constant 0 : i32
    return %arg0, %c0_i32, %c0_i32_0 : i32, i32, i32
  }
}

module attributes {stable_mosaic.version = 11 : i64} {
  func.func @_linear_kernel(%arg0: i32, %arg1: i32, %arg2: memref<16x32xf32, #tpu.memory_space<vmem>>, %arg3: memref<32x32xf32, #tpu.memory_space<vmem>>, %arg4: memref<1x32xf32, #tpu.memory_space<vmem>>, %arg5: memref<16x32xf32, #tpu.memory_space<vmem>>, %arg6: memref<16x32xf32, #tpu.memory_space<vmem>>) attributes {dimension_semantics = [#tpu.dimension_semantics<parallel>, #tpu.dimension_semantics<parallel>], iteration_bounds = array<i64: 1, 1>, scalar_prefetch = 0 : i64, scratch_operands = 0 : i64, tpu.core_type = #tpu.core_type<tc>, window_params = [{transform_indices = @transform_0, window_bounds = array<i64: 16, 32>}, {pipeline_mode = #tpu.pipeline_mode<synchronous>, transform_indices = @transform_1, window_bounds = array<i64: 32, 32>}, {pipeline_mode = #tpu.pipeline_mode<synchronous>, transform_indices = @transform_2, window_bounds = array<i64: 1, 32>}, {transform_indices = @transform_3, window_bounds = array<i64: 16, 32>}, {transform_indices = @transform_4, window_bounds = array<i64: 16, 32>}]} {
    %c0 = arith.constant 0 : index
    %c0_0 = arith.constant 0 : index
    %0 = vector.load %arg2[%c0, %c0_0] : memref<16x32xf32, #tpu.memory_space<vmem>>, vector<16x32xf32>
    %c0_1 = arith.constant 0 : index
    %c0_2 = arith.constant 0 : index
    %1 = vector.load %arg3[%c0_1, %c0_2] : memref<32x32xf32, #tpu.memory_space<vmem>>, vector<32x32xf32>
    %cst = arith.constant dense<0.000000e+00> : vector<16x32xf32>
    %2 = tpu.matmul %0, %1, %cst {dimension_numbers = #tpu.dot_dimension_numbers<[1], [0], [0], [1], [0, 0, 1, 1], [], []>} : vector<16x32xf32>, vector<32x32xf32>, vector<16x32xf32> -> vector<16x32xf32>
    %c0_3 = arith.constant 0 : index
    %c0_4 = arith.constant 0 : index
    %3 = vector.load %arg4[%c0_3, %c0_4] : memref<1x32xf32, #tpu.memory_space<vmem>>, vector<1x32xf32>
    %4 = vector.broadcast %3 : vector<1x32xf32> to vector<16x32xf32>
    %5 = arith.addf %2, %4 : vector<16x32xf32>
    %c0_5 = arith.constant 0 : index
    %c0_6 = arith.constant 0 : index
    %6 = vector.load %arg5[%c0_5, %c0_6] : memref<16x32xf32, #tpu.memory_space<vmem>>, vector<16x32xf32>
    %7 = arith.addf %5, %6 : vector<16x32xf32>
    %c0_7 = arith.constant 0 : index
    %c0_8 = arith.constant 0 : index
    %8 = vector.load %arg6[%c0_7, %c0_8] : memref<16x32xf32, #tpu.memory_space<vmem>>, vector<16x32xf32>
    tpu.vector_store %arg6[%c0_7, %c0_8], %7 {strides = array<i32>} : memref<16x32xf32, #tpu.memory_space<vmem>>, vector<16x32xf32>,
    return
  }
  func.func @transform_0(%arg0: i32, %arg1: i32) -> (i32, i32) {
    %c0_i32 = arith.constant 0 : i32
    %c0_i32_0 = arith.constant 0 : i32
    return %arg0, %c0_i32 : i32, i32
  }
  func.func @transform_1(%arg0: i32, %arg1: i32) -> (i32, i32) {
    %c0_i32 = arith.constant 0 : i32
    %c0_i32_0 = arith.constant 0 : i32
    return %c0_i32, %arg1 : i32, i32
  }
  func.func @transform_2(%arg0: i32, %arg1: i32) -> (i32, i32) {
    %c0_i32 = arith.constant 0 : i32
    %c0_i32_0 = arith.constant 0 : i32
    return %c0_i32, %arg1 : i32, i32
  }
  func.func @transform_3(%arg0: i32, %arg1: i32) -> (i32, i32) {
    %c0_i32 = arith.constant 0 : i32
    return %arg0, %arg1 : i32, i32
  }
  func.func @transform_4(%arg0: i32, %arg1: i32) -> (i32, i32) {
    %c0_i32 = arith.constant 0 : i32
    return %arg0, %arg1 : i32, i32
  }
}

module attributes {stable_mosaic.version = 11 : i64} {
  func.func @_linear_kernel(%arg0: i32, %arg1: i32, %arg2: memref<16x64xf32, #tpu.memory_space<vmem>>, %arg3: memref<64x32xf32, #tpu.memory_space<vmem>>, %arg4: memref<1x32xf32, #tpu.memory_space<vmem>>, %arg5: memref<16x32xf32, #tpu.memory_space<vmem>>, %arg6: memref<16x32xf32, #tpu.memory_space<vmem>>) attributes {dimension_semantics = [#tpu.dimension_semantics<parallel>, #tpu.dimension_semantics<parallel>], iteration_bounds = array<i64: 1, 1>, scalar_prefetch = 0 : i64, scratch_operands = 0 : i64, tpu.core_type = #tpu.core_type<tc>, window_params = [{transform_indices = @transform_0, window_bounds = array<i64: 16, 64>}, {pipeline_mode = #tpu.pipeline_mode<synchronous>, transform_indices = @transform_1, window_bounds = array<i64: 64, 32>}, {pipeline_mode = #tpu.pipeline_mode<synchronous>, transform_indices = @transform_2, window_bounds = array<i64: 1, 32>}, {transform_indices = @transform_3, window_bounds = array<i64: 16, 32>}, {transform_indices = @transform_4, window_bounds = array<i64: 16, 32>}]} {
    %c0 = arith.constant 0 : index
    %c0_0 = arith.constant 0 : index
    %0 = vector.load %arg2[%c0, %c0_0] : memref<16x64xf32, #tpu.memory_space<vmem>>, vector<16x64xf32>
    %c0_1 = arith.constant 0 : index
    %c0_2 = arith.constant 0 : index
    %1 = vector.load %arg3[%c0_1, %c0_2] : memref<64x32xf32, #tpu.memory_space<vmem>>, vector<64x32xf32>
    %cst = arith.constant dense<0.000000e+00> : vector<16x32xf32>
    %2 = tpu.matmul %0, %1, %cst {dimension_numbers = #tpu.dot_dimension_numbers<[1], [0], [0], [1], [0, 0, 1, 1], [], []>} : vector<16x64xf32>, vector<64x32xf32>, vector<16x32xf32> -> vector<16x32xf32>
    %c0_3 = arith.constant 0 : index
    %c0_4 = arith.constant 0 : index
    %3 = vector.load %arg4[%c0_3, %c0_4] : memref<1x32xf32, #tpu.memory_space<vmem>>, vector<1x32xf32>
    %4 = vector.broadcast %3 : vector<1x32xf32> to vector<16x32xf32>
    %5 = arith.addf %2, %4 : vector<16x32xf32>
    %c0_5 = arith.constant 0 : index
    %c0_6 = arith.constant 0 : index
    %6 = vector.load %arg5[%c0_5, %c0_6] : memref<16x32xf32, #tpu.memory_space<vmem>>, vector<16x32xf32>
    %7 = arith.addf %5, %6 : vector<16x32xf32>
    %c0_7 = arith.constant 0 : index
    %c0_8 = arith.constant 0 : index
    %8 = vector.load %arg6[%c0_7, %c0_8] : memref<16x32xf32, #tpu.memory_space<vmem>>, vector<16x32xf32>
    tpu.vector_store %arg6[%c0_7, %c0_8], %7 {strides = array<i32>} : memref<16x32xf32, #tpu.memory_space<vmem>>, vector<16x32xf32>,
    return
  }
  func.func @transform_0(%arg0: i32, %arg1: i32) -> (i32, i32) {
    %c0_i32 = arith.constant 0 : i32
    %c0_i32_0 = arith.constant 0 : i32
    return %arg0, %c0_i32 : i32, i32
  }
  func.func @transform_1(%arg0: i32, %arg1: i32) -> (i32, i32) {
    %c0_i32 = arith.constant 0 : i32
    %c0_i32_0 = arith.constant 0 : i32
    return %c0_i32, %arg1 : i32, i32
  }
  func.func @transform_2(%arg0: i32, %arg1: i32) -> (i32, i32) {
    %c0_i32 = arith.constant 0 : i32
    %c0_i32_0 = arith.constant 0 : i32
    return %c0_i32, %arg1 : i32, i32
  }
  func.func @transform_3(%arg0: i32, %arg1: i32) -> (i32, i32) {
    %c0_i32 = arith.constant 0 : i32
    return %arg0, %arg1 : i32, i32
  }
  func.func @transform_4(%arg0: i32, %arg1: i32) -> (i32, i32) {
    %c0_i32 = arith.constant 0 : i32
    return %arg0, %arg1 : i32, i32
  }
}

module attributes {stable_mosaic.version = 11 : i64} {
  func.func @_linear_kernel(%arg0: i32, %arg1: i32, %arg2: memref<16x32xf32, #tpu.memory_space<vmem>>, %arg3: memref<32x64xf32, #tpu.memory_space<vmem>>, %arg4: memref<1x64xf32, #tpu.memory_space<vmem>>, %arg5: memref<16x64xf32, #tpu.memory_space<vmem>>) attributes {dimension_semantics = [#tpu.dimension_semantics<parallel>, #tpu.dimension_semantics<parallel>], iteration_bounds = array<i64: 1, 1>, scalar_prefetch = 0 : i64, scratch_operands = 0 : i64, tpu.core_type = #tpu.core_type<tc>, window_params = [{transform_indices = @transform_0, window_bounds = array<i64: 16, 32>}, {pipeline_mode = #tpu.pipeline_mode<synchronous>, transform_indices = @transform_1, window_bounds = array<i64: 32, 64>}, {pipeline_mode = #tpu.pipeline_mode<synchronous>, transform_indices = @transform_2, window_bounds = array<i64: 1, 64>}, {transform_indices = @transform_3, window_bounds = array<i64: 16, 64>}]} {
    %c0 = arith.constant 0 : index
    %c0_0 = arith.constant 0 : index
    %0 = vector.load %arg2[%c0, %c0_0] : memref<16x32xf32, #tpu.memory_space<vmem>>, vector<16x32xf32>
    %c0_1 = arith.constant 0 : index
    %c0_2 = arith.constant 0 : index
    %1 = vector.load %arg3[%c0_1, %c0_2] : memref<32x64xf32, #tpu.memory_space<vmem>>, vector<32x64xf32>
    %cst = arith.constant dense<0.000000e+00> : vector<16x64xf32>
    %2 = tpu.matmul %0, %1, %cst {dimension_numbers = #tpu.dot_dimension_numbers<[1], [0], [0], [1], [0, 0, 1, 1], [], []>} : vector<16x32xf32>, vector<32x64xf32>, vector<16x64xf32> -> vector<16x64xf32>
    %c0_3 = arith.constant 0 : index
    %c0_4 = arith.constant 0 : index
    %3 = vector.load %arg4[%c0_3, %c0_4] : memref<1x64xf32, #tpu.memory_space<vmem>>, vector<1x64xf32>
    %4 = vector.broadcast %3 : vector<1x64xf32> to vector<16x64xf32>
    %5 = arith.addf %2, %4 : vector<16x64xf32>
    %6 = arith.mulf %5, %5 : vector<16x64xf32>
    %7 = arith.mulf %5, %6 : vector<16x64xf32>
    %cst_5 = arith.constant 4.471500e-02 : f32
    %8 = vector.broadcast %cst_5 : f32 to vector<16x64xf32>
    %9 = arith.mulf %8, %7 : vector<16x64xf32>
    %10 = arith.addf %5, %9 : vector<16x64xf32>
    %cst_6 = arith.constant 0.797884583 : f32
    %11 = vector.broadcast %cst_6 : f32 to vector<16x64xf32>
    %12 = arith.mulf %11, %10 : vector<16x64xf32>
    %13 = math.tanh %12 : vector<16x64xf32>
    %cst_7 = arith.constant 1.000000e+00 : f32
    %14 = vector.broadcast %cst_7 : f32 to vector<16x64xf32>
    %15 = arith.addf %14, %13 : vector<16x64xf32>
    %cst_8 = arith.constant 5.000000e-01 : f32
    %16 = vector.broadcast %cst_8 : f32 to vector<16x64xf32>
    %17 = arith.mulf %16, %15 : vector<16x64xf32>
    %18 = arith.mulf %5, %17 : vector<16x64xf32>
    %c0_9 = arith.constant 0 : index
    %c0_10 = arith.constant 0 : index
    %19 = vector.load %arg5[%c0_9, %c0_10] : memref<16x64xf32, #tpu.memory_space<vmem>>, vector<16x64xf32>
    tpu.vector_store %arg5[%c0_9, %c0_10], %18 {strides = array<i32>} : memref<16x64xf32, #tpu.memory_space<vmem>>, vector<16x64xf32>,
    return
  }
  func.func @transform_0(%arg0: i32, %arg1: i32) -> (i32, i32) {
    %c0_i32 = arith.constant 0 : i32
    %c0_i32_0 = arith.constant 0 : i32
    return %arg0, %c0_i32 : i32, i32
  }
  func.func @transform_1(%arg0: i32, %arg1: i32) -> (i32, i32) {
    %c0_i32 = arith.constant 0 : i32
    %c0_i32_0 = arith.constant 0 : i32
    return %c0_i32, %arg1 : i32, i32
  }
  func.func @transform_2(%arg0: i32, %arg1: i32) -> (i32, i32) {
    %c0_i32 = arith.constant 0 : i32
    %c0_i32_0 = arith.constant 0 : i32
    return %c0_i32, %arg1 : i32, i32
  }
  func.func @transform_3(%arg0: i32, %arg1: i32) -> (i32, i32) {
    %c0_i32 = arith.constant 0 : i32
    return %arg0, %arg1 : i32, i32
  }
}

module attributes {stable_mosaic.version = 11 : i64} {
  func.func @_linear_kernel(%arg0: i32, %arg1: i32, %arg2: memref<16x64xf32, #tpu.memory_space<vmem>>, %arg3: memref<64x32xf32, #tpu.memory_space<vmem>>, %arg4: memref<1x32xf32, #tpu.memory_space<vmem>>, %arg5: memref<16x32xf32, #tpu.memory_space<vmem>>, %arg6: memref<16x32xf32, #tpu.memory_space<vmem>>) attributes {dimension_semantics = [#tpu.dimension_semantics<parallel>, #tpu.dimension_semantics<parallel>], iteration_bounds = array<i64: 1, 1>, scalar_prefetch = 0 : i64, scratch_operands = 0 : i64, tpu.core_type = #tpu.core_type<tc>, window_params = [{transform_indices = @transform_0, window_bounds = array<i64: 16, 64>}, {pipeline_mode = #tpu.pipeline_mode<synchronous>, transform_indices = @transform_1, window_bounds = array<i64: 64, 32>}, {pipeline_mode = #tpu.pipeline_mode<synchronous>, transform_indices = @transform_2, window_bounds = array<i64: 1, 32>}, {transform_indices = @transform_3, window_bounds = array<i64: 16, 32>}, {transform_indices = @transform_4, window_bounds = array<i64: 16, 32>}]} {
    %c0 = arith.constant 0 : index
    %c0_0 = arith.constant 0 : index
    %0 = vector.load %arg2[%c0, %c0_0] : memref<16x64xf32, #tpu.memory_space<vmem>>, vector<16x64xf32>
    %c0_1 = arith.constant 0 : index
    %c0_2 = arith.constant 0 : index
    %1 = vector.load %arg3[%c0_1, %c0_2] : memref<64x32xf32, #tpu.memory_space<vmem>>, vector<64x32xf32>
    %cst = arith.constant dense<0.000000e+00> : vector<16x32xf32>
    %2 = tpu.matmul %0, %1, %cst {dimension_numbers = #tpu.dot_dimension_numbers<[1], [0], [0], [1], [0, 0, 1, 1], [], []>} : vector<16x64xf32>, vector<64x32xf32>, vector<16x32xf32> -> vector<16x32xf32>
    %c0_3 = arith.constant 0 : index
    %c0_4 = arith.constant 0 : index
    %3 = vector.load %arg4[%c0_3, %c0_4] : memref<1x32xf32, #tpu.memory_space<vmem>>, vector<1x32xf32>
    %4 = vector.broadcast %3 : vector<1x32xf32> to vector<16x32xf32>
    %5 = arith.addf %2, %4 : vector<16x32xf32>
    %c0_5 = arith.constant 0 : index
    %c0_6 = arith.constant 0 : index
    %6 = vector.load %arg5[%c0_5, %c0_6] : memref<16x32xf32, #tpu.memory_space<vmem>>, vector<16x32xf32>
    %7 = arith.addf %5, %6 : vector<16x32xf32>
    %c0_7 = arith.constant 0 : index
    %c0_8 = arith.constant 0 : index
    %8 = vector.load %arg6[%c0_7, %c0_8] : memref<16x32xf32, #tpu.memory_space<vmem>>, vector<16x32xf32>
    tpu.vector_store %arg6[%c0_7, %c0_8], %7 {strides = array<i32>} : memref<16x32xf32, #tpu.memory_space<vmem>>, vector<16x32xf32>,
    return
  }
  func.func @transform_0(%arg0: i32, %arg1: i32) -> (i32, i32) {
    %c0_i32 = arith.constant 0 : i32
    %c0_i32_0 = arith.constant 0 : i32
    return %arg0, %c0_i32 : i32, i32
  }
  func.func @transform_1(%arg0: i32, %arg1: i32) -> (i32, i32) {
    %c0_i32 = arith.constant 0 : i32
    %c0_i32_0 = arith.constant 0 : i32
    return %c0_i32, %arg1 : i32, i32
  }
  func.func @transform_2(%arg0: i32, %arg1: i32) -> (i32, i32) {
    %c0_i32 = arith.constant 0 : i32
    %c0_i32_0 = arith.constant 0 : i32
    return %c0_i32, %arg1 : i32, i32
  }
  func.func @transform_3(%arg0: i32, %arg1: i32) -> (i32, i32) {
    %c0_i32 = arith.constant 0 : i32
    return %arg0, %arg1 : i32, i32
  }
  func.func @transform_4(%arg0: i32, %arg1: i32) -> (i32, i32) {
    %c0_i32 = arith.constant 0 : i32
    return %arg0, %arg1 : i32, i32
  }
}

</mosaic_0001>

<llo_original>
// kernel: _lambda_.15
$region0: #{_lambda_.15}
  #allocation0 [shape = 'u32[]', space=smem, size = 0x4, offset = 0x4, fixed_abs, tag = 'smem constant byte address 0x4 - core index']
  #allocation1 [shape = 'u32[144,128]{1,0:T(1,128)}', space=vmem, size = 0x12000, scoped, tag = 'internal scratch']
  %s0 = inlined_call_operand.vmem [shape: f32[16,32], index: 0, kind: input, shape index: {}]
  %s1 = inlined_call_operand.vmem [shape: f32[32,96], index: 1, kind: input, shape index: {}]
  %s2 = inlined_call_operand.vmem [shape: f32[1,96], index: 2, kind: input, shape index: {}]
  %s3 = inlined_call_operand.vmem [shape: f32[16,96], index: 3, kind: output, shape index: {}]
  %s4 = sld [smem:[#allocation0]]
  $region22: #{_lambda_.15} parent=0
    _
  %s6 = ssub.s32 1, %s4
  %s7 = scalar_select 0, %s6, %s4
  // Predicated region
  $region2: #{_lambda_.15} parent=0 // pred_check
    _
  $region3: #{_lambda_.15} parent=0 // pred_check_branch
    %9 = sbr.rel (0) target = $region5
  $region4: #{_lambda_.15} parent=0 // pred_region
    _
  $region5: #{_lambda_.15} parent=0 // pred_fallthru
    _
  // Predicated region
  $region6: #{_lambda_.15} parent=0 // pred_check
    _
  $region7: #{_lambda_.15} parent=0 // pred_check_branch
    %11 = sbr.rel (0) target = $region9
  $region8: #{_lambda_.15} parent=0 // pred_region
    _
  $region9: #{_lambda_.15} parent=0 // pred_fallthru
    _
  // Predicated region
  $region10: #{_lambda_.15} parent=0 // pred_check
    _
  $region11: #{_lambda_.15} parent=0 // pred_check_branch
    %13 = sbr.rel (0) target = $region13
  $region12: #{_lambda_.15} parent=0 // pred_region
    _
  $region13: #{_lambda_.15} parent=0 // pred_fallthru
    _
  %v14 = vld [vmem:[%s0] sm:$0xff]
  %v15 = vld [vmem:[%s0 + $0x8] sm:$0xff]
  %v16 = vld [vmem:[%s1] sm:$0xff]
  %v17 = vld [vmem:[%s1 + $0x8] sm:$0xff]
  %v18 = vld [vmem:[%s1 + $0x10] sm:$0xff]
  %v19 = vld [vmem:[%s1 + $0x18] sm:$0xff]
  %v20 = vld [vmem:[%s2] sm:$0x1]
  %v22 = vlaneseq
  %v23 = vshrl.u32 %v22, 7
  %v24 = vsub.s32 0, %v23
  %v25 = vrot.slane %v20, %v24
  %vm27 = vcmask 261120
  %v29 = vsel %vm27, %v14, 0
  %v32 = vsel %vm27, %v15, 0
  %34 = vmatprep.subr.mxu0 0.0
  %35 = vmatpush1.msra.mxu0 %v16
  %36 = vmatprep.subr.mxu0 0.0
  %37 = vmatpush1.msra.mxu0 %v17
  %38 = vmatprep.subr.mxu0 0.0
  %39 = vmatpush1.msra.mxu0 %v18
  %40 = vmatprep.subr.mxu0 0.0
  %41 = vmatpush1.msra.mxu0 %v19
  %42 = vmatprep.subr.mxu0 0.0
  %43 = vmatpush1.msra.mxu0 0.0
  %44 = vmatprep.subr.mxu0 0.0
  %45 = vmatpush1.msra.mxu0 0.0
  %46 = vmatprep.subr.mxu0 0.0
  %47 = vmatpush1.msra.mxu0 0.0
  %48 = vmatprep.subr.mxu0 0.0
  %49 = vmatpush1.msra.mxu0 0.0
  %50 = vmatprep.subr.mxu0 0.0
  %51 = vmatpush1.msra.mxu0 0.0
  %52 = vmatprep.subr.mxu0 0.0
  %53 = vmatpush1.msra.mxu0 0.0
  %54 = vmatprep.subr.mxu0 0.0
  %55 = vmatpush1.msra.mxu0 0.0
  %56 = vmatprep.subr.mxu0 0.0
  %57 = vmatpush1.msra.mxu0 0.0
  %58 = vmatprep.subr.mxu0 0.0
  %59 = vmatpush1.msra.mxu0 0.0
  %60 = vmatprep.subr.mxu0 0.0
  %61 = vmatpush1.msra.mxu0 0.0
  %62 = vmatprep.subr.mxu0 0.0
  %63 = vmatpush1.msra.mxu0 0.0
  %64 = vmatprep.subr.mxu0 0.0
  %65 = vmatpush1.msra.mxu0 0.0
  %66 = vmatprep.subr.mxu0 0.0
  %67 = vmatpush1.msra.mxu0 0.0
  %68 = vmatprep.subr.mxu0 0.0
  %69 = vmatpush1.msra.mxu0 0.0
  %70 = vmatprep.subr.mxu0 0.0
  %71 = vmatpush1.msra.mxu0 0.0
  %72 = vmatprep.subr.mxu0 0.0
  %73 = vmatpush1.msra.mxu0 0.0
  %74 = vmatprep.subr.mxu0 0.0
  %75 = vmatpush1.msra.mxu0 0.0
  %76 = vmatprep.subr.mxu0 0.0
  %77 = vmatpush1.msra.mxu0 0.0
  %78 = vmatprep.subr.mxu0 0.0
  %79 = vmatpush1.msra.mxu0 0.0
  %80 = vmatprep.subr.mxu0 0.0
  %81 = vmatpush1.msra.mxu0 0.0
  %82 = vmatprep.subr.mxu0 0.0
  %83 = vmatpush1.msra.mxu0 0.0
  %84 = vmatprep.subr.mxu0 0.0
  %85 = vmatpush1.msra.mxu0 0.0
  %86 = vmatprep.subr.mxu0 0.0
  %87 = vmatpush1.msra.mxu0 0.0
  %88 = vmatprep.subr.mxu0 0.0
  %89 = vmatpush1.msra.mxu0 0.0
  %90 = vmatprep.subr.mxu0 0.0
  %91 = vmatpush1.msra.mxu0 0.0
  %92 = vmatprep.subr.mxu0 0.0
  %93 = vmatpush1.msra.mxu0 0.0
  %94 = vmatprep.subr.mxu0 0.0
  %95 = vmatpush1.msra.mxu0 0.0
  %96 = vmatprep.subr.mxu0 0.0
  %97 = vmatpush1.msra.mxu0 0.0
  %98 = vmatprep.mubr.f32.mxu0 0.0
  %99 = vmatmul.mubr.f32.gmra.mrb[0].mxu0 %v29
  %v100 = vpop.f32.mrb[0].mxu0
  %v101 = vadd.f32 %v25, %v100
  %v102 = vpop.f32.mrb[0].mxu0
  %103 = vmatprep.mubr.f32.mxu0 0.0
  %104 = vmatmul.mubr.f32.gmra.mrb[0].mxu0 %v32
  %v105 = vpop.f32.mrb[0].mxu0
  %v106 = vadd.f32 %v25, %v105
  %v107 = vpop.f32.mrb[0].mxu0
  %108 = vdwg.mxu0
  %vm109 = vcmask 785408
  %110 = vst.msk [vmem:[%s3] sm:$0xff] %vm109, %v101
  %111 = vst.msk [vmem:[%s3 + $0x8] sm:$0xff] %vm109, %v106
  // Predicated region
  $region14: #{_lambda_.15} parent=0 // pred_check
    _
  $region15: #{_lambda_.15} parent=0 // pred_check_branch
    %113 = sbr.rel (0) target = $region17
  $region16: #{_lambda_.15} parent=0 // pred_region
    _
  $region17: #{_lambda_.15} parent=0 // pred_fallthru
    _
  // Predicated region
  $region18: #{_lambda_.15} parent=0 // pred_check
    _
  $region19: #{_lambda_.15} parent=0 // pred_check_branch
    %115 = sbr.rel (0) target = $region21
  $region20: #{_lambda_.15} parent=0 // pred_region
    _
  $region21: #{_lambda_.15} parent=0 // pred_fallthru
    _

// kernel: _lambda_.14
$region0: #{_lambda_.14}
  #allocation0 [shape = 'u32[]', space=smem, size = 0x4, offset = 0x4, fixed_abs, tag = 'smem constant byte address 0x4 - core index']
  #allocation1 [shape = 'u32[144,128]{1,0:T(1,128)}', space=vmem, size = 0x12000, scoped, tag = 'internal scratch']
  %s0 = inlined_call_operand.vmem [shape: f32[16,32], index: 0, kind: input, shape index: {}]
  %s1 = inlined_call_operand.vmem [shape: f32[1,32], index: 1, kind: input, shape index: {}]
  %s2 = inlined_call_operand.vmem [shape: f32[1,32], index: 2, kind: input, shape index: {}]
  %s3 = inlined_call_operand.vmem [shape: f32[16,32], index: 3, kind: output, shape index: {}]
  %s4 = sld [smem:[#allocation0]]
  $region22: #{_lambda_.14} parent=0
    _
  %s6 = ssub.s32 1, %s4
  %s7 = scalar_select 0, %s6, %s4
  // Predicated region
  $region2: #{_lambda_.14} parent=0 // pred_check
    _
  $region3: #{_lambda_.14} parent=0 // pred_check_branch
    %9 = sbr.rel (0) target = $region5
  $region4: #{_lambda_.14} parent=0 // pred_region
    _
  $region5: #{_lambda_.14} parent=0 // pred_fallthru
    _
  // Predicated region
  $region6: #{_lambda_.14} parent=0 // pred_check
    _
  $region7: #{_lambda_.14} parent=0 // pred_check_branch
    %11 = sbr.rel (0) target = $region9
  $region8: #{_lambda_.14} parent=0 // pred_region
    _
  $region9: #{_lambda_.14} parent=0 // pred_fallthru
    _
  // Predicated region
  $region10: #{_lambda_.14} parent=0 // pred_check
    _
  $region11: #{_lambda_.14} parent=0 // pred_check_branch
    %13 = sbr.rel (0) target = $region13
  $region12: #{_lambda_.14} parent=0 // pred_region
    _
  $region13: #{_lambda_.14} parent=0 // pred_fallthru
    _
  %v14 = vld [vmem:[%s0] sm:$0xff]
  %v15 = vld [vmem:[%s0 + $0x8] sm:$0xff]
  %vm16 = vcmask 261120
  %v17 = vsel %vm16, %v14, 0.0
  %18 = vadd.xlane.f32.xlu0 %v17
  %v19 = vpop.xlane.xlu0 %18
  %v20 = vsel %vm16, %v15, 0.0
  %21 = vadd.xlane.f32.xlu0 %v20
  %v22 = vpop.xlane.xlu0 %21
  %v23 = vrcp.pop 32.0
  %v24 = vmul.f32 %v19, %v23
  %v25 = vmul.f32 %v22, %v23
  %v26 = vsub.f32 %v14, %v24
  %v27 = vsub.f32 %v15, %v25
  %v28 = vmul.f32 %v26, %v26
  %v29 = vmul.f32 %v27, %v27
  %v30 = vsel %vm16, %v28, 0.0
  %31 = vadd.xlane.f32.xlu0 %v30
  %v32 = vpop.xlane.xlu0 %31
  %v33 = vsel %vm16, %v29, 0.0
  %34 = vadd.xlane.f32.xlu0 %v33
  %v35 = vpop.xlane.xlu0 %34
  %v36 = vmul.f32 %v32, %v23
  %v37 = vmul.f32 %v35, %v23
  %v38 = vadd.f32 %v36, 1e-05
  %v39 = vadd.f32 %v37, 1e-05
  %v40 = vrsqrt.pop %v38
  %v41 = vrsqrt.pop %v39
  %v42 = vmul.f32 %v26, %v40
  %v43 = vmul.f32 %v27, %v41
  %v44 = vld [vmem:[%s1] sm:$0x1]
  %v46 = vlaneseq
  %v47 = vshrl.u32 %v46, 7
  %v48 = vsub.s32 0, %v47
  %v49 = vrot.slane %v44, %v48
  %v51 = vmul.f32 %v42, %v49
  %v52 = vmul.f32 %v43, %v49
  %v53 = vld [vmem:[%s2] sm:$0x1]
  %v55 = vlaneseq
  %v56 = vshrl.u32 %v55, 7
  %v57 = vsub.s32 0, %v56
  %v58 = vrot.slane %v53, %v57
  %v60 = vadd.f32 %v51, %v58
  %v61 = vadd.f32 %v52, %v58
  %62 = vst.msk [vmem:[%s3] sm:$0xff] %vm16, %v60
  %63 = vst.msk [vmem:[%s3 + $0x8] sm:$0xff] %vm16, %v61
  // Predicated region
  $region14: #{_lambda_.14} parent=0 // pred_check
    _
  $region15: #{_lambda_.14} parent=0 // pred_check_branch
    %65 = sbr.rel (0) target = $region17
  $region16: #{_lambda_.14} parent=0 // pred_region
    _
  $region17: #{_lambda_.14} parent=0 // pred_fallthru
    _
  // Predicated region
  $region18: #{_lambda_.14} parent=0 // pred_check
    _
  $region19: #{_lambda_.14} parent=0 // pred_check_branch
    %67 = sbr.rel (0) target = $region21
  $region20: #{_lambda_.14} parent=0 // pred_region
    _
  $region21: #{_lambda_.14} parent=0 // pred_fallthru
    _

// kernel: _lambda_.16
$region0: #{_lambda_.16}
  #allocation0 [shape = 'u32[]', space=smem, size = 0x4, offset = 0x4, fixed_abs, tag = 'smem constant byte address 0x4 - core index']
  #allocation1 [shape = 'u32[144,128]{1,0:T(1,128)}', space=vmem, size = 0x12000, scoped, tag = 'internal scratch']
  %s0 = inlined_call_operand.vmem [shape: f32[8,8,8], index: 0, kind: input, shape index: {}]
  %s1 = inlined_call_operand.vmem [shape: f32[8,8,8], index: 1, kind: input, shape index: {}]
  %s2 = inlined_call_operand.vmem [shape: f32[8,8,8], index: 2, kind: input, shape index: {}]
  %s3 = inlined_call_operand.vmem [shape: f32[8,8,8], index: 3, kind: output, shape index: {}]
  %s4 = sld [smem:[#allocation0]]
  $region45: #{_lambda_.16} parent=0
    _
  %s6 = ssub.s32 1, %s4
  %s7 = scalar_select 0, %s6, %s4
  loop: start=0, step=1, limit=10
  $region2: #{_lambda_.16} parent=0 // loop_pre_header
    _
  $region3: #{_lambda_.16} parent=0 // loop_header
    %s9 = sphi 0, %s13
    %p10 = scmp.ge.s32.totalorder %s9, 10
    %s19 = sphi 0, %s21
    %s22 = sphi 0, %s19
    %s23 = sphi 0, %s22
    %s39 = sphi 0, %s23
    %s45 = sphi 0, %s47
    %s48 = sphi 0, %s45
    %s49 = sphi 0, %s48
    %s65 = sphi 0, %s49
    %s71 = sphi 0, %s73
    %s74 = sphi 0, %s71
    %s75 = sphi 0, %s74
    %s91 = sphi 0, %s75
    %s97 = sphi 0, %s99
    %s100 = sphi 0, %s97
    %s101 = sphi 0, %s100
    %s117 = sphi 0, %s101
  $region4: #{_lambda_.16} parent=0 // loop_header_branch
    %12 = sbr.rel (%p10) target = $region8
  $region5: #{_lambda_.16} parent=0 // loop_body
    %s14 = ssub.s32 %s9, 1
    %s15 = ssub.s32 %s9, 2
    %s16 = sadd.s32 %s9, 1
    %s17 = ssub.s32 %s9, %s16
    %p18 = scmp.eq.s32.totalorder %s17, 0
    %s20 = sadd.s32 %s19, 1
    %s21 = scalar_select %p18, %s19, %s20
    %p24 = pneg %p18
    %p25 = scmp.eq.s32.totalorder %s9, 7
    %p26 = por %p24, %p25
    %p27 = scmp.ne.s32.totalorder %s19, %s22
    %p28 = scmp.eq.s32.totalorder %s9, 0
    %p29 = por %p27, %p28
    %p30 = scmp.ne.s32.totalorder %s19, %s22
    %p31 = scmp.eq.s32.totalorder %s14, 7
    %p32 = por %p30, %p31
    %p33 = scmp.ne.s32.totalorder %s22, %s23
    %p34 = scmp.eq.s32.totalorder %s14, 0
    %p35 = por %p33, %p34
    %p36 = scmp.ne.s32.totalorder %s22, %s23
    %p37 = scmp.eq.s32.totalorder %s15, 7
    %p38 = por %p36, %p37
    %p40 = scmp.ne.s32.totalorder %s23, %s39
    %p41 = scmp.eq.s32.totalorder %s15, 0
    %p42 = por %p40, %p41
    %s43 = ssub.s32 %s9, %s16
    %p44 = scmp.eq.s32.totalorder %s43, 0
    %s46 = sadd.s32 %s45, 1
    %s47 = scalar_select %p44, %s45, %s46
    %p50 = pneg %p44
    %p51 = scmp.eq.s32.totalorder %s9, 7
    %p52 = por %p50, %p51
    %p53 = scmp.ne.s32.totalorder %s45, %s48
    %p54 = scmp.eq.s32.totalorder %s9, 0
    %p55 = por %p53, %p54
    %p56 = scmp.ne.s32.totalorder %s45, %s48
    %p57 = scmp.eq.s32.totalorder %s14, 7
    %p58 = por %p56, %p57
    %p59 = scmp.ne.s32.totalorder %s48, %s49
    %p60 = scmp.eq.s32.totalorder %s14, 0
    %p61 = por %p59, %p60
    %p62 = scmp.ne.s32.totalorder %s48, %s49
    %p63 = scmp.eq.s32.totalorder %s15, 7
    %p64 = por %p62, %p63
    %p66 = scmp.ne.s32.totalorder %s49, %s65
    %p67 = scmp.eq.s32.totalorder %s15, 0
    %p68 = por %p66, %p67
    %s69 = ssub.s32 %s9, %s16
    %p70 = scmp.eq.s32.totalorder %s69, 0
    %s72 = sadd.s32 %s71, 1
    %s73 = scalar_select %p70, %s71, %s72
    %p76 = pneg %p70
    %p77 = scmp.eq.s32.totalorder %s9, 7
    %p78 = por %p76, %p77
    %p79 = scmp.ne.s32.totalorder %s71, %s74
    %p80 = scmp.eq.s32.totalorder %s9, 0
    %p81 = por %p79, %p80
    %p82 = scmp.ne.s32.totalorder %s71, %s74
    %p83 = scmp.eq.s32.totalorder %s14, 7
    %p84 = por %p82, %p83
    %p85 = scmp.ne.s32.totalorder %s74, %s75
    %p86 = scmp.eq.s32.totalorder %s14, 0
    %p87 = por %p85, %p86
    %p88 = scmp.ne.s32.totalorder %s74, %s75
    %p89 = scmp.eq.s32.totalorder %s15, 7
    %p90 = por %p88, %p89
    %p92 = scmp.ne.s32.totalorder %s75, %s91
    %p93 = scmp.eq.s32.totalorder %s15, 0
    %p94 = por %p92, %p93
    %s95 = ssub.s32 %s9, %s16
    %p96 = scmp.eq.s32.totalorder %s95, 0
    %s98 = sadd.s32 %s97, 1
    %s99 = scalar_select %p96, %s97, %s98
    %p102 = pneg %p96
    %p103 = scmp.eq.s32.totalorder %s9, 7
    %p104 = por %p102, %p103
    %p105 = scmp.ne.s32.totalorder %s97, %s100
    %p106 = scmp.eq.s32.totalorder %s9, 0
    %p107 = por %p105, %p106
    %p108 = scmp.ne.s32.totalorder %s97, %s100
    %p109 = scmp.eq.s32.totalorder %s14, 7
    %p110 = por %p108, %p109
    %p111 = scmp.ne.s32.totalorder %s100, %s101
    %p112 = scmp.eq.s32.totalorder %s14, 0
    %p113 = por %p111, %p112
    %p114 = scmp.ne.s32.totalorder %s100, %s101
    %p115 = scmp.eq.s32.totalorder %s15, 7
    %p116 = por %p114, %p115
    %p118 = scmp.ne.s32.totalorder %s101, %s117
    %p119 = scmp.eq.s32.totalorder %s15, 0
    %p120 = por %p118, %p119
    %p121 = scmp.le.s32.totalorder 1, %s9
    %p122 = scmp.lt.s32.totalorder %s9, 9
    %p123 = pnand %p121, %p122
    %p124 = pneg %p123
    // Predicated region
    $region9: #{_lambda_.16} parent=5 // pred_check
      _
    $region10: #{_lambda_.16} parent=5 // pred_check_branch
      %126 = sbr.rel (%p123) target = $region12
    $region11: #{_lambda_.16} parent=5 // pred_region
      %s127 = ssub.s32 %s9, 1
    $region12: #{_lambda_.16} parent=5 // pred_fallthru
      _
    %p128 = scmp.lt.s32.totalorder %s9, 8
    // Predicated region
    $region13: #{_lambda_.16} parent=5 // pred_check
      %p129 = pneg %p128
    $region14: #{_lambda_.16} parent=5 // pred_check_branch
      %131 = sbr.rel (%p129) target = $region16
    $region15: #{_lambda_.16} parent=5 // pred_region
      // Predicated region
      $region17: #{_lambda_.16} parent=15 // pred_check
        %p132 = pneg %p29
      $region18: #{_lambda_.16} parent=15 // pred_check_branch
        %134 = sbr.rel (%p132) target = $region20
      $region19: #{_lambda_.16} parent=15 // pred_region
        %p135 = scmp.lt.s32.totalorder %s9, 7
        %s136 = scalar_select %p135, %s9, 7
        %s137 = smul.addr %s136, 8
        %s138 = scalar_lea.vmem %s0, %s137
      $region20: #{_lambda_.16} parent=15 // pred_fallthru
        _
      // Predicated region
      $region21: #{_lambda_.16} parent=15 // pred_check
        %p139 = pneg %p55
      $region22: #{_lambda_.16} parent=15 // pred_check_branch
        %141 = sbr.rel (%p139) target = $region24
      $region23: #{_lambda_.16} parent=15 // pred_region
        %p142 = scmp.lt.s32.totalorder %s9, 7
        %s143 = scalar_select %p142, %s9, 7
        %s144 = smul.addr %s143, 8
        %s145 = scalar_lea.vmem %s1, %s144
      $region24: #{_lambda_.16} parent=15 // pred_fallthru
        _
      // Predicated region
      $region25: #{_lambda_.16} parent=15 // pred_check
        %p146 = pneg %p81
      $region26: #{_lambda_.16} parent=15 // pred_check_branch
        %148 = sbr.rel (%p146) target = $region28
      $region27: #{_lambda_.16} parent=15 // pred_region
        %p149 = scmp.lt.s32.totalorder %s9, 7
        %s150 = scalar_select %p149, %s9, 7
        %s151 = smul.addr %s150, 8
        %s152 = scalar_lea.vmem %s2, %s151
      $region28: #{_lambda_.16} parent=15 // pred_fallthru
        _
    $region16: #{_lambda_.16} parent=5 // pred_fallthru
      _
    %p153 = scmp.le.s32.totalorder 1, %s9
    %p154 = scmp.lt.s32.totalorder %s9, 9
    %p155 = pnand %p153, %p154
    %p156 = pneg %p155
    // Predicated region
    $region29: #{_lambda_.16} parent=5 // pred_check
      _
    $region30: #{_lambda_.16} parent=5 // pred_check_branch
      %158 = sbr.rel (%p155) target = $region32
    $region31: #{_lambda_.16} parent=5 // pred_region
      %s159 = ssub.s32 %s9, 1
      %p160 = scmp.lt.s32.totalorder %s14, 7
      %s161 = scalar_select %p160, %s14, 7
      %s162 = smul.addr %s161, 8
      %s163 = scalar_lea.vmem %s0, %s162
      %p164 = pneg %p35
      %p165 = pneg %p32
      %p166 = scmp.lt.s32.totalorder %s14, 7
      %s167 = scalar_select %p166, %s14, 7
      %s168 = smul.addr %s167, 8
      %s169 = scalar_lea.vmem %s1, %s168
      %p170 = pneg %p61
      %p171 = pneg %p58
      %p172 = scmp.lt.s32.totalorder %s14, 7
      %s173 = scalar_select %p172, %s14, 7
      %s174 = smul.addr %s173, 8
      %s175 = scalar_lea.vmem %s2, %s174
      %p176 = pneg %p87
      %p177 = pneg %p84
      %p178 = pneg %p113
      %p179 = pneg %p110
      %p180 = scmp.lt.s32.totalorder %s14, 7
      %s181 = scalar_select %p180, %s14, 7
      %s182 = smul.addr %s181, 8
      %s183 = scalar_lea.vmem %s3, %s182
      %p184 = scmp.lt.s32.totalorder %s14, 7
      %s185 = scalar_select %p184, %s14, 7
      %s186 = smul.addr %s185, 8
      %s187 = scalar_lea.vmem %s0, %s186
      %p188 = scmp.lt.s32.totalorder %s14, 7
      %s189 = scalar_select %p188, %s14, 7
      %s190 = smul.addr %s189, 8
      %s191 = scalar_lea.vmem %s1, %s190
      %p192 = scmp.lt.s32.totalorder %s14, 7
      %s193 = scalar_select %p192, %s14, 7
      %s194 = smul.addr %s193, 8
      %s195 = scalar_lea.vmem %s2, %s194
      %p196 = scmp.lt.s32.totalorder %s14, 7
      %s197 = scalar_select %p196, %s14, 7
      %s198 = smul.addr %s197, 8
      %s199 = scalar_lea.vmem %s3, %s198
      %v200 = vld [vmem:[%s187] sm:$0xff]
      %v201 = vld [vmem:[%s191] sm:$0xff]
      %v202 = vld [vmem:[%s195] sm:$0xff]
      %vm203 = vcmask 64512
      %v205 = vsel %vm203, %v200, 0
      %v208 = vsel %vm203, %v201, 0
      %210 = vmatprep.subr.mxu0 0.0
      %211 = vmatpush1.xpose.msra.mxu0 %v208
      %212 = vmatprep.subr.mxu0 0.0
      %213 = vmatpush1.xpose.msra.mxu0 0.0
      %214 = vmatprep.subr.mxu0 0.0
      %215 = vmatpush1.xpose.msra.mxu0 0.0
      %216 = vmatprep.subr.mxu0 0.0
      %217 = vmatpush1.xpose.msra.mxu0 0.0
      %218 = vmatprep.subr.mxu0 0.0
      %219 = vmatpush1.xpose.msra.mxu0 0.0
      %220 = vmatprep.subr.mxu0 0.0
      %221 = vmatpush1.xpose.msra.mxu0 0.0
      %222 = vmatprep.subr.mxu0 0.0
      %223 = vmatpush1.xpose.msra.mxu0 0.0
      %224 = vmatprep.subr.mxu0 0.0
      %225 = vmatpush1.xpose.msra.mxu0 0.0
      %226 = vmatprep.subr.mxu0 0.0
      %227 = vmatpush1.xpose.msra.mxu0 0.0
      %228 = vmatprep.subr.mxu0 0.0
      %229 = vmatpush1.xpose.msra.mxu0 0.0
      %230 = vmatprep.subr.mxu0 0.0
      %231 = vmatpush1.xpose.msra.mxu0 0.0
      %232 = vmatprep.subr.mxu0 0.0
      %233 = vmatpush1.xpose.msra.mxu0 0.0
      %234 = vmatprep.subr.mxu0 0.0
      %235 = vmatpush1.xpose.msra.mxu0 0.0
      %236 = vmatprep.subr.mxu0 0.0
      %237 = vmatpush1.xpose.msra.mxu0 0.0
      %238 = vmatprep.subr.mxu0 0.0
      %239 = vmatpush1.xpose.msra.mxu0 0.0
      %240 = vmatprep.subr.mxu0 0.0
      %241 = vmatpush1.xpose.msra.mxu0 0.0
      %242 = vmatprep.subr.mxu0 0.0
      %243 = vmatpush1.xpose.msra.mxu0 0.0
      %244 = vmatprep.subr.mxu0 0.0
      %245 = vmatpush1.xpose.msra.mxu0 0.0
      %246 = vmatprep.subr.mxu0 0.0
      %247 = vmatpush1.xpose.msra.mxu0 0.0
      %248 = vmatprep.subr.mxu0 0.0
      %249 = vmatpush1.xpose.msra.mxu0 0.0
      %250 = vmatprep.subr.mxu0 0.0
      %251 = vmatpush1.xpose.msra.mxu0 0.0
      %252 = vmatprep.subr.mxu0 0.0
      %253 = vmatpush1.xpose.msra.mxu0 0.0
      %254 = vmatprep.subr.mxu0 0.0
      %255 = vmatpush1.xpose.msra.mxu0 0.0
      %256 = vmatprep.subr.mxu0 0.0
      %257 = vmatpush1.xpose.msra.mxu0 0.0
      %258 = vmatprep.subr.mxu0 0.0
      %259 = vmatpush1.xpose.msra.mxu0 0.0
      %260 = vmatprep.subr.mxu0 0.0
      %261 = vmatpush1.xpose.msra.mxu0 0.0
      %262 = vmatprep.subr.mxu0 0.0
      %263 = vmatpush1.xpose.msra.mxu0 0.0
      %264 = vmatprep.subr.mxu0 0.0
      %265 = vmatpush1.xpose.msra.mxu0 0.0
      %266 = vmatprep.subr.mxu0 0.0
      %267 = vmatpush1.xpose.msra.mxu0 0.0
      %268 = vmatprep.subr.mxu0 0.0
      %269 = vmatpush1.xpose.msra.mxu0 0.0
      %270 = vmatprep.subr.mxu0 0.0
      %271 = vmatpush1.xpose.msra.mxu0 0.0
      %272 = vmatprep.subr.mxu0 0.0
      %273 = vmatpush1.xpose.msra.mxu0 0.0
      %274 = vmatprep.mubr.f32.mxu0 0.0
      %275 = vmatmul.mubr.f32.gmra.mrb[0].mxu0 %v205
      %v276 = vpop.f32.mrb[0].mxu0
      %v277 = vadd.f32 0.0, %v276
      %v278 = vpop.f32.mrb[0].mxu0
      %279 = vdwg.mxu0
      %v280 = vmul.f32 %v277, 0.35355338
      %v281 = vsel %vm203, %v280, -inf
      %282 = vmax.xlane.f32.xlu0 %v281
      %v283 = vpop.xlane.xlu0 %282
      %v284 = vsub.f32 %v280, %v283
      %v285 = vmul.f32 %v284, 1.442695
      %v286 = vpow.pop %v285
      %v287 = vsel %vm203, %v286, 0.0
      %288 = vadd.xlane.f32.xlu0 %v287
      %v289 = vpop.xlane.xlu0 %288
      %v290 = vrcp.pop %v289
      %v291 = vmul.f32 %v286, %v290
      %v293 = vsel %vm203, %v291, 0
      %295 = vmatprep.subr.mxu0 0.0
      %296 = vmatpush1.msra.mxu0 %v202
      %297 = vmatprep.subr.mxu0 0.0
      %298 = vmatpush1.msra.mxu0 0.0
      %299 = vmatprep.subr.mxu0 0.0
      %300 = vmatpush1.msra.mxu0 0.0
      %301 = vmatprep.subr.mxu0 0.0
      %302 = vmatpush1.msra.mxu0 0.0
      %303 = vmatprep.subr.mxu0 0.0
      %304 = vmatpush1.msra.mxu0 0.0
      %305 = vmatprep.subr.mxu0 0.0
      %306 = vmatpush1.msra.mxu0 0.0
      %307 = vmatprep.subr.mxu0 0.0
      %308 = vmatpush1.msra.mxu0 0.0
      %309 = vmatprep.subr.mxu0 0.0
      %310 = vmatpush1.msra.mxu0 0.0
      %311 = vmatprep.subr.mxu0 0.0
      %312 = vmatpush1.msra.mxu0 0.0
      %313 = vmatprep.subr.mxu0 0.0
      %314 = vmatpush1.msra.mxu0 0.0
      %315 = vmatprep.subr.mxu0 0.0
      %316 = vmatpush1.msra.mxu0 0.0
      %317 = vmatprep.subr.mxu0 0.0
      %318 = vmatpush1.msra.mxu0 0.0
      %319 = vmatprep.subr.mxu0 0.0
      %320 = vmatpush1.msra.mxu0 0.0
      %321 = vmatprep.subr.mxu0 0.0
      %322 = vmatpush1.msra.mxu0 0.0
      %323 = vmatprep.subr.mxu0 0.0
      %324 = vmatpush1.msra.mxu0 0.0
      %325 = vmatprep.subr.mxu0 0.0
      %326 = vmatpush1.msra.mxu0 0.0
      %327 = vmatprep.subr.mxu0 0.0
      %328 = vmatpush1.msra.mxu0 0.0
      %329 = vmatprep.subr.mxu0 0.0
      %330 = vmatpush1.msra.mxu0 0.0
      %331 = vmatprep.subr.mxu0 0.0
      %332 = vmatpush1.msra.mxu0 0.0
      %333 = vmatprep.subr.mxu0 0.0
      %334 = vmatpush1.msra.mxu0 0.0
      %335 = vmatprep.subr.mxu0 0.0
      %336 = vmatpush1.msra.mxu0 0.0
      %337 = vmatprep.subr.mxu0 0.0
      %338 = vmatpush1.msra.mxu0 0.0
      %339 = vmatprep.subr.mxu0 0.0
      %340 = vmatpush1.msra.mxu0 0.0
      %341 = vmatprep.subr.mxu0 0.0
      %342 = vmatpush1.msra.mxu0 0.0
      %343 = vmatprep.subr.mxu0 0.0
      %344 = vmatpush1.msra.mxu0 0.0
      %345 = vmatprep.subr.mxu0 0.0
      %346 = vmatpush1.msra.mxu0 0.0
      %347 = vmatprep.subr.mxu0 0.0
      %348 = vmatpush1.msra.mxu0 0.0
      %349 = vmatprep.subr.mxu0 0.0
      %350 = vmatpush1.msra.mxu0 0.0
      %351 = vmatprep.subr.mxu0 0.0
      %352 = vmatpush1.msra.mxu0 0.0
      %353 = vmatprep.subr.mxu0 0.0
      %354 = vmatpush1.msra.mxu0 0.0
      %355 = vmatprep.subr.mxu0 0.0
      %356 = vmatpush1.msra.mxu0 0.0
      %357 = vmatprep.subr.mxu0 0.0
      %358 = vmatpush1.msra.mxu0 0.0
      %359 = vmatprep.mubr.f32.mxu0 0.0
      %360 = vmatmul.mubr.f32.gmra.mrb[0].mxu0 %v293
      %v361 = vpop.f32.mrb[0].mxu0
      %v362 = vadd.f32 0.0, %v361
      %v363 = vpop.f32.mrb[0].mxu0
      %364 = vdwg.mxu0
      %365 = vst.msk [vmem:[%s199] sm:$0xff] %vm203, %v362
      %p366 = scmp.lt.s32.totalorder %s14, 7
      %s367 = scalar_select %p366, %s14, 7
      %s368 = smul.addr %s367, 8
      %s369 = scalar_lea.vmem %s3, %s368
      // Predicated region
      $region33: #{_lambda_.16} parent=31 // pred_check
        %p370 = pneg %p110
      $region34: #{_lambda_.16} parent=31 // pred_check_branch
        %372 = sbr.rel (%p370) target = $region36
      $region35: #{_lambda_.16} parent=31 // pred_region
        _
      $region36: #{_lambda_.16} parent=31 // pred_fallthru
        _
    $region32: #{_lambda_.16} parent=5 // pred_fallthru
      _
    %p373 = scmp.le.s32.totalorder 2, %s9
    // Predicated region
    $region37: #{_lambda_.16} parent=5 // pred_check
      %p374 = pneg %p373
    $region38: #{_lambda_.16} parent=5 // pred_check_branch
      %376 = sbr.rel (%p374) target = $region40
    $region39: #{_lambda_.16} parent=5 // pred_region
      %s377 = ssub.s32 %s9, 2
      // Predicated region
      $region41: #{_lambda_.16} parent=39 // pred_check
        %p378 = pneg %p116
      $region42: #{_lambda_.16} parent=39 // pred_check_branch
        %380 = sbr.rel (%p378) target = $region44
      $region43: #{_lambda_.16} parent=39 // pred_region
        %p381 = scmp.lt.s32.totalorder %s15, 7
        %s382 = scalar_select %p381, %s15, 7
        %s383 = smul.addr %s382, 8
        %s384 = scalar_lea.vmem %s3, %s383
      $region44: #{_lambda_.16} parent=39 // pred_fallthru
        _
    $region40: #{_lambda_.16} parent=5 // pred_fallthru
      _
  $region6: #{_lambda_.16} parent=0 // loop_footer
    %s13 = sadd.s32 1, %s9
  $region7: #{_lambda_.16} parent=0 // loop_footer_branch
    %8 = sbr.rel target = $region3
  $region8: #{_lambda_.16} parent=0 // loop_exit
    _

// kernel: _lambda_.17
$region0: #{_lambda_.17}
  #allocation0 [shape = 'u32[]', space=smem, size = 0x4, offset = 0x4, fixed_abs, tag = 'smem constant byte address 0x4 - core index']
  #allocation1 [shape = 'u32[144,128]{1,0:T(1,128)}', space=vmem, size = 0x12000, scoped, tag = 'internal scratch']
  %s0 = inlined_call_operand.vmem [shape: f32[16,32], index: 0, kind: input, shape index: {}]
  %s1 = inlined_call_operand.vmem [shape: f32[32,32], index: 1, kind: input, shape index: {}]
  %s2 = inlined_call_operand.vmem [shape: f32[1,32], index: 2, kind: input, shape index: {}]
  %s3 = inlined_call_operand.vmem [shape: f32[16,32], index: 3, kind: input, shape index: {}]
  %s4 = inlined_call_operand.vmem [shape: f32[16,32], index: 4, kind: output, shape index: {}]
  %s5 = sld [smem:[#allocation0]]
  $region26: #{_lambda_.17} parent=0
    _
  %s7 = ssub.s32 1, %s5
  %s8 = scalar_select 0, %s7, %s5
  // Predicated region
  $region2: #{_lambda_.17} parent=0 // pred_check
    _
  $region3: #{_lambda_.17} parent=0 // pred_check_branch
    %10 = sbr.rel (0) target = $region5
  $region4: #{_lambda_.17} parent=0 // pred_region
    _
  $region5: #{_lambda_.17} parent=0 // pred_fallthru
    _
  // Predicated region
  $region6: #{_lambda_.17} parent=0 // pred_check
    _
  $region7: #{_lambda_.17} parent=0 // pred_check_branch
    %12 = sbr.rel (0) target = $region9
  $region8: #{_lambda_.17} parent=0 // pred_region
    _
  $region9: #{_lambda_.17} parent=0 // pred_fallthru
    _
  // Predicated region
  $region10: #{_lambda_.17} parent=0 // pred_check
    _
  $region11: #{_lambda_.17} parent=0 // pred_check_branch
    %14 = sbr.rel (0) target = $region13
  $region12: #{_lambda_.17} parent=0 // pred_region
    _
  $region13: #{_lambda_.17} parent=0 // pred_fallthru
    _
  // Predicated region
  $region14: #{_lambda_.17} parent=0 // pred_check
    _
  $region15: #{_lambda_.17} parent=0 // pred_check_branch
    %16 = sbr.rel (0) target = $region17
  $region16: #{_lambda_.17} parent=0 // pred_region
    _
  $region17: #{_lambda_.17} parent=0 // pred_fallthru
    _
  %v17 = vld [vmem:[%s0] sm:$0xff]
  %v18 = vld [vmem:[%s0 + $0x8] sm:$0xff]
  %v19 = vld [vmem:[%s1] sm:$0xff]
  %v20 = vld [vmem:[%s1 + $0x8] sm:$0xff]
  %v21 = vld [vmem:[%s1 + $0x10] sm:$0xff]
  %v22 = vld [vmem:[%s1 + $0x18] sm:$0xff]
  %v23 = vld [vmem:[%s2] sm:$0x1]
  %v25 = vlaneseq
  %v26 = vshrl.u32 %v25, 7
  %v27 = vsub.s32 0, %v26
  %v28 = vrot.slane %v23, %v27
  %vm30 = vcmask 261120
  %v32 = vsel %vm30, %v17, 0
  %v35 = vsel %vm30, %v18, 0
  %37 = vmatprep.subr.mxu0 0.0
  %38 = vmatpush1.msra.mxu0 %v19
  %39 = vmatprep.subr.mxu0 0.0
  %40 = vmatpush1.msra.mxu0 %v20
  %41 = vmatprep.subr.mxu0 0.0
  %42 = vmatpush1.msra.mxu0 %v21
  %43 = vmatprep.subr.mxu0 0.0
  %44 = vmatpush1.msra.mxu0 %v22
  %45 = vmatprep.subr.mxu0 0.0
  %46 = vmatpush1.msra.mxu0 0.0
  %47 = vmatprep.subr.mxu0 0.0
  %48 = vmatpush1.msra.mxu0 0.0
  %49 = vmatprep.subr.mxu0 0.0
  %50 = vmatpush1.msra.mxu0 0.0
  %51 = vmatprep.subr.mxu0 0.0
  %52 = vmatpush1.msra.mxu0 0.0
  %53 = vmatprep.subr.mxu0 0.0
  %54 = vmatpush1.msra.mxu0 0.0
  %55 = vmatprep.subr.mxu0 0.0
  %56 = vmatpush1.msra.mxu0 0.0
  %57 = vmatprep.subr.mxu0 0.0
  %58 = vmatpush1.msra.mxu0 0.0
  %59 = vmatprep.subr.mxu0 0.0
  %60 = vmatpush1.msra.mxu0 0.0
  %61 = vmatprep.subr.mxu0 0.0
  %62 = vmatpush1.msra.mxu0 0.0
  %63 = vmatprep.subr.mxu0 0.0
  %64 = vmatpush1.msra.mxu0 0.0
  %65 = vmatprep.subr.mxu0 0.0
  %66 = vmatpush1.msra.mxu0 0.0
  %67 = vmatprep.subr.mxu0 0.0
  %68 = vmatpush1.msra.mxu0 0.0
  %69 = vmatprep.subr.mxu0 0.0
  %70 = vmatpush1.msra.mxu0 0.0
  %71 = vmatprep.subr.mxu0 0.0
  %72 = vmatpush1.msra.mxu0 0.0
  %73 = vmatprep.subr.mxu0 0.0
  %74 = vmatpush1.msra.mxu0 0.0
  %75 = vmatprep.subr.mxu0 0.0
  %76 = vmatpush1.msra.mxu0 0.0
  %77 = vmatprep.subr.mxu0 0.0
  %78 = vmatpush1.msra.mxu0 0.0
  %79 = vmatprep.subr.mxu0 0.0
  %80 = vmatpush1.msra.mxu0 0.0
  %81 = vmatprep.subr.mxu0 0.0
  %82 = vmatpush1.msra.mxu0 0.0
  %83 = vmatprep.subr.mxu0 0.0
  %84 = vmatpush1.msra.mxu0 0.0
  %85 = vmatprep.subr.mxu0 0.0
  %86 = vmatpush1.msra.mxu0 0.0
  %87 = vmatprep.subr.mxu0 0.0
  %88 = vmatpush1.msra.mxu0 0.0
  %89 = vmatprep.subr.mxu0 0.0
  %90 = vmatpush1.msra.mxu0 0.0
  %91 = vmatprep.subr.mxu0 0.0
  %92 = vmatpush1.msra.mxu0 0.0
  %93 = vmatprep.subr.mxu0 0.0
  %94 = vmatpush1.msra.mxu0 0.0
  %95 = vmatprep.subr.mxu0 0.0
  %96 = vmatpush1.msra.mxu0 0.0
  %97 = vmatprep.subr.mxu0 0.0
  %98 = vmatpush1.msra.mxu0 0.0
  %99 = vmatprep.subr.mxu0 0.0
  %100 = vmatpush1.msra.mxu0 0.0
  %101 = vmatprep.mubr.f32.mxu0 0.0
  %102 = vmatmul.mubr.f32.gmra.mrb[0].mxu0 %v32
  %v103 = vpop.f32.mrb[0].mxu0
  %v104 = vadd.f32 %v28, %v103
  %v105 = vpop.f32.mrb[0].mxu0
  %106 = vmatprep.mubr.f32.mxu0 0.0
  %107 = vmatmul.mubr.f32.gmra.mrb[0].mxu0 %v35
  %v108 = vpop.f32.mrb[0].mxu0
  %v109 = vadd.f32 %v28, %v108
  %v110 = vpop.f32.mrb[0].mxu0
  %111 = vdwg.mxu0
  %v112 = vld [vmem:[%s3] sm:$0xff]
  %v113 = vld [vmem:[%s3 + $0x8] sm:$0xff]
  %v114 = vadd.f32 %v104, %v112
  %v115 = vadd.f32 %v109, %v113
  %116 = vst.msk [vmem:[%s4] sm:$0xff] %vm30, %v114
  %117 = vst.msk [vmem:[%s4 + $0x8] sm:$0xff] %vm30, %v115
  // Predicated region
  $region18: #{_lambda_.17} parent=0 // pred_check
    _
  $region19: #{_lambda_.17} parent=0 // pred_check_branch
    %119 = sbr.rel (0) target = $region21
  $region20: #{_lambda_.17} parent=0 // pred_region
    _
  $region21: #{_lambda_.17} parent=0 // pred_fallthru
    _
  // Predicated region
  $region22: #{_lambda_.17} parent=0 // pred_check
    _
  $region23: #{_lambda_.17} parent=0 // pred_check_branch
    %121 = sbr.rel (0) target = $region25
  $region24: #{_lambda_.17} parent=0 // pred_region
    _
  $region25: #{_lambda_.17} parent=0 // pred_fallthru
    _

// kernel: _lambda_.20
$region0: #{_lambda_.20}
  #allocation0 [shape = 'u32[]', space=smem, size = 0x4, offset = 0x4, fixed_abs, tag = 'smem constant byte address 0x4 - core index']
  #allocation1 [shape = 'u32[144,128]{1,0:T(1,128)}', space=vmem, size = 0x12000, scoped, tag = 'internal scratch']
  %s0 = inlined_call_operand.vmem [shape: f32[16,64], index: 0, kind: input, shape index: {}]
  %s1 = inlined_call_operand.vmem [shape: f32[64,32], index: 1, kind: input, shape index: {}]
  %s2 = inlined_call_operand.vmem [shape: f32[1,32], index: 2, kind: input, shape index: {}]
  %s3 = inlined_call_operand.vmem [shape: f32[16,32], index: 3, kind: input, shape index: {}]
  %s4 = inlined_call_operand.vmem [shape: f32[16,32], index: 4, kind: output, shape index: {}]
  %s5 = sld [smem:[#allocation0]]
  $region26: #{_lambda_.20} parent=0
    _
  %s7 = ssub.s32 1, %s5
  %s8 = scalar_select 0, %s7, %s5
  // Predicated region
  $region2: #{_lambda_.20} parent=0 // pred_check
    _
  $region3: #{_lambda_.20} parent=0 // pred_check_branch
    %10 = sbr.rel (0) target = $region5
  $region4: #{_lambda_.20} parent=0 // pred_region
    _
  $region5: #{_lambda_.20} parent=0 // pred_fallthru
    _
  // Predicated region
  $region6: #{_lambda_.20} parent=0 // pred_check
    _
  $region7: #{_lambda_.20} parent=0 // pred_check_branch
    %12 = sbr.rel (0) target = $region9
  $region8: #{_lambda_.20} parent=0 // pred_region
    _
  $region9: #{_lambda_.20} parent=0 // pred_fallthru
    _
  // Predicated region
  $region10: #{_lambda_.20} parent=0 // pred_check
    _
  $region11: #{_lambda_.20} parent=0 // pred_check_branch
    %14 = sbr.rel (0) target = $region13
  $region12: #{_lambda_.20} parent=0 // pred_region
    _
  $region13: #{_lambda_.20} parent=0 // pred_fallthru
    _
  // Predicated region
  $region14: #{_lambda_.20} parent=0 // pred_check
    _
  $region15: #{_lambda_.20} parent=0 // pred_check_branch
    %16 = sbr.rel (0) target = $region17
  $region16: #{_lambda_.20} parent=0 // pred_region
    _
  $region17: #{_lambda_.20} parent=0 // pred_fallthru
    _
  %v17 = vld [vmem:[%s0] sm:$0xff]
  %v18 = vld [vmem:[%s0 + $0x8] sm:$0xff]
  %v19 = vld [vmem:[%s1] sm:$0xff]
  %v20 = vld [vmem:[%s1 + $0x8] sm:$0xff]
  %v21 = vld [vmem:[%s1 + $0x10] sm:$0xff]
  %v22 = vld [vmem:[%s1 + $0x18] sm:$0xff]
  %v23 = vld [vmem:[%s1 + $0x20] sm:$0xff]
  %v24 = vld [vmem:[%s1 + $0x28] sm:$0xff]
  %v25 = vld [vmem:[%s1 + $0x30] sm:$0xff]
  %v26 = vld [vmem:[%s1 + $0x38] sm:$0xff]
  %v27 = vld [vmem:[%s2] sm:$0x1]
  %v29 = vlaneseq
  %v30 = vshrl.u32 %v29, 7
  %v31 = vsub.s32 0, %v30
  %v32 = vrot.slane %v27, %v31
  %vm34 = vcmask 523264
  %v36 = vsel %vm34, %v17, 0
  %v39 = vsel %vm34, %v18, 0
  %41 = vmatprep.subr.mxu0 0.0
  %42 = vmatpush1.msra.mxu0 %v19
  %43 = vmatprep.subr.mxu0 0.0
  %44 = vmatpush1.msra.mxu0 %v20
  %45 = vmatprep.subr.mxu0 0.0
  %46 = vmatpush1.msra.mxu0 %v21
  %47 = vmatprep.subr.mxu0 0.0
  %48 = vmatpush1.msra.mxu0 %v22
  %49 = vmatprep.subr.mxu0 0.0
  %50 = vmatpush1.msra.mxu0 %v23
  %51 = vmatprep.subr.mxu0 0.0
  %52 = vmatpush1.msra.mxu0 %v24
  %53 = vmatprep.subr.mxu0 0.0
  %54 = vmatpush1.msra.mxu0 %v25
  %55 = vmatprep.subr.mxu0 0.0
  %56 = vmatpush1.msra.mxu0 %v26
  %57 = vmatprep.subr.mxu0 0.0
  %58 = vmatpush1.msra.mxu0 0.0
  %59 = vmatprep.subr.mxu0 0.0
  %60 = vmatpush1.msra.mxu0 0.0
  %61 = vmatprep.subr.mxu0 0.0
  %62 = vmatpush1.msra.mxu0 0.0
  %63 = vmatprep.subr.mxu0 0.0
  %64 = vmatpush1.msra.mxu0 0.0
  %65 = vmatprep.subr.mxu0 0.0
  %66 = vmatpush1.msra.mxu0 0.0
  %67 = vmatprep.subr.mxu0 0.0
  %68 = vmatpush1.msra.mxu0 0.0
  %69 = vmatprep.subr.mxu0 0.0
  %70 = vmatpush1.msra.mxu0 0.0
  %71 = vmatprep.subr.mxu0 0.0
  %72 = vmatpush1.msra.mxu0 0.0
  %73 = vmatprep.subr.mxu0 0.0
  %74 = vmatpush1.msra.mxu0 0.0
  %75 = vmatprep.subr.mxu0 0.0
  %76 = vmatpush1.msra.mxu0 0.0
  %77 = vmatprep.subr.mxu0 0.0
  %78 = vmatpush1.msra.mxu0 0.0
  %79 = vmatprep.subr.mxu0 0.0
  %80 = vmatpush1.msra.mxu0 0.0
  %81 = vmatprep.subr.mxu0 0.0
  %82 = vmatpush1.msra.mxu0 0.0
  %83 = vmatprep.subr.mxu0 0.0
  %84 = vmatpush1.msra.mxu0 0.0
  %85 = vmatprep.subr.mxu0 0.0
  %86 = vmatpush1.msra.mxu0 0.0
  %87 = vmatprep.subr.mxu0 0.0
  %88 = vmatpush1.msra.mxu0 0.0
  %89 = vmatprep.subr.mxu0 0.0
  %90 = vmatpush1.msra.mxu0 0.0
  %91 = vmatprep.subr.mxu0 0.0
  %92 = vmatpush1.msra.mxu0 0.0
  %93 = vmatprep.subr.mxu0 0.0
  %94 = vmatpush1.msra.mxu0 0.0
  %95 = vmatprep.subr.mxu0 0.0
  %96 = vmatpush1.msra.mxu0 0.0
  %97 = vmatprep.subr.mxu0 0.0
  %98 = vmatpush1.msra.mxu0 0.0
  %99 = vmatprep.subr.mxu0 0.0
  %100 = vmatpush1.msra.mxu0 0.0
  %101 = vmatprep.subr.mxu0 0.0
  %102 = vmatpush1.msra.mxu0 0.0
  %103 = vmatprep.subr.mxu0 0.0
  %104 = vmatpush1.msra.mxu0 0.0
  %105 = vmatprep.mubr.f32.mxu0 0.0
  %106 = vmatmul.mubr.f32.gmra.mrb[0].mxu0 %v36
  %v107 = vpop.f32.mrb[0].mxu0
  %v108 = vadd.f32 %v32, %v107
  %v109 = vpop.f32.mrb[0].mxu0
  %110 = vmatprep.mubr.f32.mxu0 0.0
  %111 = vmatmul.mubr.f32.gmra.mrb[0].mxu0 %v39
  %v112 = vpop.f32.mrb[0].mxu0
  %v113 = vadd.f32 %v32, %v112
  %v114 = vpop.f32.mrb[0].mxu0
  %115 = vdwg.mxu0
  %v116 = vld [vmem:[%s3] sm:$0xff]
  %v117 = vld [vmem:[%s3 + $0x8] sm:$0xff]
  %v118 = vadd.f32 %v108, %v116
  %v119 = vadd.f32 %v113, %v117
  %vm120 = vcmask 261120
  %121 = vst.msk [vmem:[%s4] sm:$0xff] %vm120, %v118
  %122 = vst.msk [vmem:[%s4 + $0x8] sm:$0xff] %vm120, %v119
  // Predicated region
  $region18: #{_lambda_.20} parent=0 // pred_check
    _
  $region19: #{_lambda_.20} parent=0 // pred_check_branch
    %124 = sbr.rel (0) target = $region21
  $region20: #{_lambda_.20} parent=0 // pred_region
    _
  $region21: #{_lambda_.20} parent=0 // pred_fallthru
    _
  // Predicated region
  $region22: #{_lambda_.20} parent=0 // pred_check
    _
  $region23: #{_lambda_.20} parent=0 // pred_check_branch
    %126 = sbr.rel (0) target = $region25
  $region24: #{_lambda_.20} parent=0 // pred_region
    _
  $region25: #{_lambda_.20} parent=0 // pred_fallthru
    _

// kernel: _lambda_.19
$region0: #{_lambda_.19}
  #allocation0 [shape = 'u32[]', space=smem, size = 0x4, offset = 0x4, fixed_abs, tag = 'smem constant byte address 0x4 - core index']
  #allocation1 [shape = 'u32[144,128]{1,0:T(1,128)}', space=vmem, size = 0x12000, scoped, tag = 'internal scratch']
  %s0 = inlined_call_operand.vmem [shape: f32[16,32], index: 0, kind: input, shape index: {}]
  %s1 = inlined_call_operand.vmem [shape: f32[32,64], index: 1, kind: input, shape index: {}]
  %s2 = inlined_call_operand.vmem [shape: f32[1,64], index: 2, kind: input, shape index: {}]
  %s3 = inlined_call_operand.vmem [shape: f32[16,64], index: 3, kind: output, shape index: {}]
  %s4 = sld [smem:[#allocation0]]
  $region22: #{_lambda_.19} parent=0
    _
  %s6 = ssub.s32 1, %s4
  %s7 = scalar_select 0, %s6, %s4
  // Predicated region
  $region2: #{_lambda_.19} parent=0 // pred_check
    _
  $region3: #{_lambda_.19} parent=0 // pred_check_branch
    %9 = sbr.rel (0) target = $region5
  $region4: #{_lambda_.19} parent=0 // pred_region
    _
  $region5: #{_lambda_.19} parent=0 // pred_fallthru
    _
  // Predicated region
  $region6: #{_lambda_.19} parent=0 // pred_check
    _
  $region7: #{_lambda_.19} parent=0 // pred_check_branch
    %11 = sbr.rel (0) target = $region9
  $region8: #{_lambda_.19} parent=0 // pred_region
    _
  $region9: #{_lambda_.19} parent=0 // pred_fallthru
    _
  // Predicated region
  $region10: #{_lambda_.19} parent=0 // pred_check
    _
  $region11: #{_lambda_.19} parent=0 // pred_check_branch
    %13 = sbr.rel (0) target = $region13
  $region12: #{_lambda_.19} parent=0 // pred_region
    _
  $region13: #{_lambda_.19} parent=0 // pred_fallthru
    _
  %v14 = vld [vmem:[%s0] sm:$0xff]
  %v15 = vld [vmem:[%s0 + $0x8] sm:$0xff]
  %v16 = vld [vmem:[%s1] sm:$0xff]
  %v17 = vld [vmem:[%s1 + $0x8] sm:$0xff]
  %v18 = vld [vmem:[%s1 + $0x10] sm:$0xff]
  %v19 = vld [vmem:[%s1 + $0x18] sm:$0xff]
  %v20 = vld [vmem:[%s2] sm:$0x1]
  %v22 = vlaneseq
  %v23 = vshrl.u32 %v22, 7
  %v24 = vsub.s32 0, %v23
  %v25 = vrot.slane %v20, %v24
  %vm27 = vcmask 261120
  %v29 = vsel %vm27, %v14, 0
  %v32 = vsel %vm27, %v15, 0
  %34 = vmatprep.subr.mxu0 0.0
  %35 = vmatpush1.msra.mxu0 %v16
  %36 = vmatprep.subr.mxu0 0.0
  %37 = vmatpush1.msra.mxu0 %v17
  %38 = vmatprep.subr.mxu0 0.0
  %39 = vmatpush1.msra.mxu0 %v18
  %40 = vmatprep.subr.mxu0 0.0
  %41 = vmatpush1.msra.mxu0 %v19
  %42 = vmatprep.subr.mxu0 0.0
  %43 = vmatpush1.msra.mxu0 0.0
  %44 = vmatprep.subr.mxu0 0.0
  %45 = vmatpush1.msra.mxu0 0.0
  %46 = vmatprep.subr.mxu0 0.0
  %47 = vmatpush1.msra.mxu0 0.0
  %48 = vmatprep.subr.mxu0 0.0
  %49 = vmatpush1.msra.mxu0 0.0
  %50 = vmatprep.subr.mxu0 0.0
  %51 = vmatpush1.msra.mxu0 0.0
  %52 = vmatprep.subr.mxu0 0.0
  %53 = vmatpush1.msra.mxu0 0.0
  %54 = vmatprep.subr.mxu0 0.0
  %55 = vmatpush1.msra.mxu0 0.0
  %56 = vmatprep.subr.mxu0 0.0
  %57 = vmatpush1.msra.mxu0 0.0
  %58 = vmatprep.subr.mxu0 0.0
  %59 = vmatpush1.msra.mxu0 0.0
  %60 = vmatprep.subr.mxu0 0.0
  %61 = vmatpush1.msra.mxu0 0.0
  %62 = vmatprep.subr.mxu0 0.0
  %63 = vmatpush1.msra.mxu0 0.0
  %64 = vmatprep.subr.mxu0 0.0
  %65 = vmatpush1.msra.mxu0 0.0
  %66 = vmatprep.subr.mxu0 0.0
  %67 = vmatpush1.msra.mxu0 0.0
  %68 = vmatprep.subr.mxu0 0.0
  %69 = vmatpush1.msra.mxu0 0.0
  %70 = vmatprep.subr.mxu0 0.0
  %71 = vmatpush1.msra.mxu0 0.0
  %72 = vmatprep.subr.mxu0 0.0
  %73 = vmatpush1.msra.mxu0 0.0
  %74 = vmatprep.subr.mxu0 0.0
  %75 = vmatpush1.msra.mxu0 0.0
  %76 = vmatprep.subr.mxu0 0.0
  %77 = vmatpush1.msra.mxu0 0.0
  %78 = vmatprep.subr.mxu0 0.0
  %79 = vmatpush1.msra.mxu0 0.0
  %80 = vmatprep.subr.mxu0 0.0
  %81 = vmatpush1.msra.mxu0 0.0
  %82 = vmatprep.subr.mxu0 0.0
  %83 = vmatpush1.msra.mxu0 0.0
  %84 = vmatprep.subr.mxu0 0.0
  %85 = vmatpush1.msra.mxu0 0.0
  %86 = vmatprep.subr.mxu0 0.0
  %87 = vmatpush1.msra.mxu0 0.0
  %88 = vmatprep.subr.mxu0 0.0
  %89 = vmatpush1.msra.mxu0 0.0
  %90 = vmatprep.subr.mxu0 0.0
  %91 = vmatpush1.msra.mxu0 0.0
  %92 = vmatprep.subr.mxu0 0.0
  %93 = vmatpush1.msra.mxu0 0.0
  %94 = vmatprep.subr.mxu0 0.0
  %95 = vmatpush1.msra.mxu0 0.0
  %96 = vmatprep.subr.mxu0 0.0
  %97 = vmatpush1.msra.mxu0 0.0
  %98 = vmatprep.mubr.f32.mxu0 0.0
  %99 = vmatmul.mubr.f32.gmra.mrb[0].mxu0 %v29
  %v100 = vpop.f32.mrb[0].mxu0
  %v101 = vadd.f32 %v25, %v100
  %v102 = vpop.f32.mrb[0].mxu0
  %103 = vmatprep.mubr.f32.mxu0 0.0
  %104 = vmatmul.mubr.f32.gmra.mrb[0].mxu0 %v32
  %v105 = vpop.f32.mrb[0].mxu0
  %v106 = vadd.f32 %v25, %v105
  %v107 = vpop.f32.mrb[0].mxu0
  %108 = vdwg.mxu0
  %v109 = vmul.f32 %v101, %v101
  %v110 = vmul.f32 %v106, %v106
  %v111 = vmul.f32 %v101, %v109
  %v112 = vmul.f32 %v106, %v110
  %v113 = vmul.f32 %v111, 0.044715
  %v114 = vmul.f32 %v112, 0.044715
  %v115 = vadd.f32 %v101, %v113
  %v116 = vadd.f32 %v106, %v114
  %v117 = vmul.f32 %v115, 0.7978846
  %v118 = vmul.f32 %v116, 0.7978846
  %v119 = vtanh.pop %v117
  %v120 = vtanh.pop %v118
  %v121 = vadd.f32 %v119, 1.0
  %v122 = vadd.f32 %v120, 1.0
  %v123 = vmul.f32 %v121, 0.5
  %v124 = vmul.f32 %v122, 0.5
  %v125 = vmul.f32 %v101, %v123
  %v126 = vmul.f32 %v106, %v124
  %vm127 = vcmask 523264
  %128 = vst.msk [vmem:[%s3] sm:$0xff] %vm127, %v125
  %129 = vst.msk [vmem:[%s3 + $0x8] sm:$0xff] %vm127, %v126
  // Predicated region
  $region14: #{_lambda_.19} parent=0 // pred_check
    _
  $region15: #{_lambda_.19} parent=0 // pred_check_branch
    %131 = sbr.rel (0) target = $region17
  $region16: #{_lambda_.19} parent=0 // pred_region
    _
  $region17: #{_lambda_.19} parent=0 // pred_fallthru
    _
  // Predicated region
  $region18: #{_lambda_.19} parent=0 // pred_check
    _
  $region19: #{_lambda_.19} parent=0 // pred_check_branch
    %133 = sbr.rel (0) target = $region21
  $region20: #{_lambda_.19} parent=0 // pred_region
    _
  $region21: #{_lambda_.19} parent=0 // pred_fallthru
    _

// kernel: _lambda_.27
$region0: #{_lambda_.27}
  #allocation0 [shape = 'u32[]', space=smem, size = 0x4, offset = 0x4, fixed_abs, tag = 'smem constant byte address 0x4 - core index']
  #allocation1 [shape = 'u32[144,128]{1,0:T(1,128)}', space=vmem, size = 0x12000, scoped, tag = 'internal scratch']
  %s0 = inlined_call_operand.vmem [shape: f32[16,64], index: 0, kind: input, shape index: {}]
  %s1 = inlined_call_operand.vmem [shape: f32[64,32], index: 1, kind: input, shape index: {}]
  %s2 = inlined_call_operand.vmem [shape: f32[1,32], index: 2, kind: input, shape index: {}]
  %s3 = inlined_call_operand.vmem [shape: f32[16,32], index: 3, kind: input, shape index: {}]
  %s4 = inlined_call_operand.hbm [shape: f32[16,32], index: 4, kind: output, shape index: {}]
  %s5 = sld [smem:[#allocation0]]
  $region26: #{_lambda_.27} parent=0
    _
  %s7 = ssub.s32 1, %s5
  %s8 = scalar_select 0, %s7, %s5
  $region1: #{_lambda_.27} parent=0
    #allocation2 [shape = 'u8[8192]{0}', space=vmem, size = 0x2000, scoped, tag = 'output window, operand 0, single buffered']
    #allocation3 [shape = 's32[1]{0}', space=sflag, size = 0x4, scoped, tag = 'scoped memory for _lambda_.27']
    %9 = vsyncpa [#allocation3], 0
    // Predicated region
    $region2: #{_lambda_.27} parent=1 // pred_check
      _
    $region3: #{_lambda_.27} parent=1 // pred_check_branch
      %11 = sbr.rel (0) target = $region5
    $region4: #{_lambda_.27} parent=1 // pred_region
      _
    $region5: #{_lambda_.27} parent=1 // pred_fallthru
      _
    // Predicated region
    $region6: #{_lambda_.27} parent=1 // pred_check
      _
    $region7: #{_lambda_.27} parent=1 // pred_check_branch
      %13 = sbr.rel (0) target = $region9
    $region8: #{_lambda_.27} parent=1 // pred_region
      _
    $region9: #{_lambda_.27} parent=1 // pred_fallthru
      _
    // Predicated region
    $region10: #{_lambda_.27} parent=1 // pred_check
      _
    $region11: #{_lambda_.27} parent=1 // pred_check_branch
      %15 = sbr.rel (0) target = $region13
    $region12: #{_lambda_.27} parent=1 // pred_region
      _
    $region13: #{_lambda_.27} parent=1 // pred_fallthru
      _
    // Predicated region
    $region14: #{_lambda_.27} parent=1 // pred_check
      _
    $region15: #{_lambda_.27} parent=1 // pred_check_branch
      %17 = sbr.rel (0) target = $region17
    $region16: #{_lambda_.27} parent=1 // pred_region
      _
    $region17: #{_lambda_.27} parent=1 // pred_fallthru
      _
    %v18 = vld [vmem:[%s0] sm:$0xff]
    %v19 = vld [vmem:[%s0 + $0x8] sm:$0xff]
    %v20 = vld [vmem:[%s1] sm:$0xff]
    %v21 = vld [vmem:[%s1 + $0x8] sm:$0xff]
    %v22 = vld [vmem:[%s1 + $0x10] sm:$0xff]
    %v23 = vld [vmem:[%s1 + $0x18] sm:$0xff]
    %v24 = vld [vmem:[%s1 + $0x20] sm:$0xff]
    %v25 = vld [vmem:[%s1 + $0x28] sm:$0xff]
    %v26 = vld [vmem:[%s1 + $0x30] sm:$0xff]
    %v27 = vld [vmem:[%s1 + $0x38] sm:$0xff]
    %v28 = vld [vmem:[%s2] sm:$0x1]
    %v30 = vlaneseq
    %v31 = vshrl.u32 %v30, 7
    %v32 = vsub.s32 0, %v31
    %v33 = vrot.slane %v28, %v32
    %vm35 = vcmask 523264
    %v37 = vsel %vm35, %v18, 0
    %v40 = vsel %vm35, %v19, 0
    %42 = vmatprep.subr.mxu0 0.0
    %43 = vmatpush1.msra.mxu0 %v20
    %44 = vmatprep.subr.mxu0 0.0
    %45 = vmatpush1.msra.mxu0 %v21
    %46 = vmatprep.subr.mxu0 0.0
    %47 = vmatpush1.msra.mxu0 %v22
    %48 = vmatprep.subr.mxu0 0.0
    %49 = vmatpush1.msra.mxu0 %v23
    %50 = vmatprep.subr.mxu0 0.0
    %51 = vmatpush1.msra.mxu0 %v24
    %52 = vmatprep.subr.mxu0 0.0
    %53 = vmatpush1.msra.mxu0 %v25
    %54 = vmatprep.subr.mxu0 0.0
    %55 = vmatpush1.msra.mxu0 %v26
    %56 = vmatprep.subr.mxu0 0.0
    %57 = vmatpush1.msra.mxu0 %v27
    %58 = vmatprep.subr.mxu0 0.0
    %59 = vmatpush1.msra.mxu0 0.0
    %60 = vmatprep.subr.mxu0 0.0
    %61 = vmatpush1.msra.mxu0 0.0
    %62 = vmatprep.subr.mxu0 0.0
    %63 = vmatpush1.msra.mxu0 0.0
    %64 = vmatprep.subr.mxu0 0.0
    %65 = vmatpush1.msra.mxu0 0.0
    %66 = vmatprep.subr.mxu0 0.0
    %67 = vmatpush1.msra.mxu0 0.0
    %68 = vmatprep.subr.mxu0 0.0
    %69 = vmatpush1.msra.mxu0 0.0
    %70 = vmatprep.subr.mxu0 0.0
    %71 = vmatpush1.msra.mxu0 0.0
    %72 = vmatprep.subr.mxu0 0.0
    %73 = vmatpush1.msra.mxu0 0.0
    %74 = vmatprep.subr.mxu0 0.0
    %75 = vmatpush1.msra.mxu0 0.0
    %76 = vmatprep.subr.mxu0 0.0
    %77 = vmatpush1.msra.mxu0 0.0
    %78 = vmatprep.subr.mxu0 0.0
    %79 = vmatpush1.msra.mxu0 0.0
    %80 = vmatprep.subr.mxu0 0.0
    %81 = vmatpush1.msra.mxu0 0.0
    %82 = vmatprep.subr.mxu0 0.0
    %83 = vmatpush1.msra.mxu0 0.0
    %84 = vmatprep.subr.mxu0 0.0
    %85 = vmatpush1.msra.mxu0 0.0
    %86 = vmatprep.subr.mxu0 0.0
    %87 = vmatpush1.msra.mxu0 0.0
    %88 = vmatprep.subr.mxu0 0.0
    %89 = vmatpush1.msra.mxu0 0.0
    %90 = vmatprep.subr.mxu0 0.0
    %91 = vmatpush1.msra.mxu0 0.0
    %92 = vmatprep.subr.mxu0 0.0
    %93 = vmatpush1.msra.mxu0 0.0
    %94 = vmatprep.subr.mxu0 0.0
    %95 = vmatpush1.msra.mxu0 0.0
    %96 = vmatprep.subr.mxu0 0.0
    %97 = vmatpush1.msra.mxu0 0.0
    %98 = vmatprep.subr.mxu0 0.0
    %99 = vmatpush1.msra.mxu0 0.0
    %100 = vmatprep.subr.mxu0 0.0
    %101 = vmatpush1.msra.mxu0 0.0
    %102 = vmatprep.subr.mxu0 0.0
    %103 = vmatpush1.msra.mxu0 0.0
    %104 = vmatprep.subr.mxu0 0.0
    %105 = vmatpush1.msra.mxu0 0.0
    %106 = vmatprep.mubr.f32.mxu0 0.0
    %107 = vmatmul.mubr.f32.gmra.mrb[0].mxu0 %v37
    %v108 = vpop.f32.mrb[0].mxu0
    %v109 = vadd.f32 %v33, %v108
    %v110 = vpop.f32.mrb[0].mxu0
    %111 = vmatprep.mubr.f32.mxu0 0.0
    %112 = vmatmul.mubr.f32.gmra.mrb[0].mxu0 %v40
    %v113 = vpop.f32.mrb[0].mxu0
    %v114 = vadd.f32 %v33, %v113
    %v115 = vpop.f32.mrb[0].mxu0
    %116 = vdwg.mxu0
    %v117 = vld [vmem:[%s3] sm:$0xff]
    %v118 = vld [vmem:[%s3 + $0x8] sm:$0xff]
    %v119 = vadd.f32 %v109, %v117
    %v120 = vadd.f32 %v114, %v118
    %vm121 = vcmask 261120
    %122 = vst.msk [vmem:[#allocation2] sm:$0xff] %vm121, %v119
    %123 = vst.msk [vmem:[#allocation2 + $0x8] sm:$0xff] %vm121, %v120
    // Predicated region
    $region18: #{_lambda_.27} parent=1 // pred_check
      _
    $region19: #{_lambda_.27} parent=1 // pred_check_branch
      %125 = sbr.rel (0) target = $region21
    $region20: #{_lambda_.27} parent=1 // pred_region
      %s127 = ssub.s32 256, 256
      %128 = vsyncadd [#allocation3], %s127
      %s129 = sshll.u32 [#allocation2], 4
      %s130 = int_to_ptr.vmem [resolvable:$true] %s129
      %135 = dma.vmem_to_hbm [thread:$0]  %s130, 256, %s4, [#allocation3], 128, 128, 8
    $region21: #{_lambda_.27} parent=1 // pred_fallthru
      _
    // Predicated region
    $region22: #{_lambda_.27} parent=1 // pred_check
      _
    $region23: #{_lambda_.27} parent=1 // pred_check_branch
      %137 = sbr.rel (0) target = $region25
    $region24: #{_lambda_.27} parent=1 // pred_region
      %138 = dma.done [#allocation3], 256
    $region25: #{_lambda_.27} parent=1 // pred_fallthru
      _
    %139 = vsyncpa [#allocation3], 1

</llo_original>
